<compile_context>
chip_gen: v7x
topology: tpu7x:2x2x1
jax: 0.10.0
libtpu: 0.0.40
codegen_flags: <defaults>
</compile_context>

<pallas_src>
import jax
import jax.numpy as jnp
from jax.experimental import pallas as pl
from jax.experimental.pallas import tpu as pltpu

LN_EPS = 1e-5
_INV_SQRT2 = 0.7071067811865476


def _round_up(n, m):
    return ((n + m - 1) // m) * m


def _sublane(dtype):
    return {4: 8, 2: 16, 1: 32}.get(jnp.dtype(dtype).itemsize, 8)


def _gelu_exact(h):
    # Exact erf-based GELU; matches torch nn.GELU() default.
    return 0.5 * h * (1.0 + jax.lax.erf(h * _INV_SQRT2))


def _layer_norm(z, gamma, beta):
    # Single-pass LayerNorm: var = E[z^2] - mean^2 (f32 throughout).
    mean = jnp.mean(z, axis=-1, keepdims=True)
    meansq = jnp.mean(z * z, axis=-1, keepdims=True)
    var = meansq - mean * mean
    zn = (z - mean) * jax.lax.rsqrt(var + LN_EPS)
    return zn * gamma + beta


# ---------------------------------------------------------------------------
# Kernels
# ---------------------------------------------------------------------------
def _mlp_fused_kernel(x_ref, w1_ref, b1_ref, w2_ref, b2_ref,
                      gamma_ref, beta_ref, out_ref):
    """Whole-H path: both weight matrices resident in VMEM."""
    x_in = x_ref[...]                                           # (TR, D)

    # Linear 1 (MXU, narrow operands, f32 accumulate)
    h = jnp.dot(x_in.astype(w1_ref.dtype), w1_ref[...],
                preferred_element_type=jnp.float32)
    h = h + b1_ref[...].astype(jnp.float32)                     # (1, H) bcast
    h = _gelu_exact(h)

    # Linear 2
    y = jnp.dot(h.astype(w2_ref.dtype), w2_ref[...],
                preferred_element_type=jnp.float32)
    y = y + b2_ref[...].astype(jnp.float32)

    # Residual + LayerNorm (f32)
    z = x_in.astype(jnp.float32) + y
    out = _layer_norm(z, gamma_ref[...].astype(jnp.float32),
                      beta_ref[...].astype(jnp.float32))
    out_ref[...] = out.astype(out_ref.dtype)


def _mlp_hsplit_kernel(x_ref, w1_ref, b1_ref, w2_ref, b2_ref,
                       gamma_ref, beta_ref, out_ref, acc_ref):
    """H-streamed path: accumulate over hidden-dim blocks in a f32 scratch."""
    k = pl.program_id(1)

    @pl.when(k == 0)
    def _():
        acc_ref[...] = jnp.zeros_like(acc_ref)

    x_in = x_ref[...]                                           # (TR, D)
    h = jnp.dot(x_in.astype(w1_ref.dtype), w1_ref[...],         # (TR, TH)
                preferred_element_type=jnp.float32)
    h = h + b1_ref[...].astype(jnp.float32)
    h = _gelu_exact(h)
    acc_ref[...] += jnp.dot(h.astype(w2_ref.dtype), w2_ref[...],
                            preferred_element_type=jnp.float32)

    @pl.when(k == pl.num_programs(1) - 1)
    def _():
        y = acc_ref[...] + b2_ref[...].astype(jnp.float32)
        z = x_in.astype(jnp.float32) + y
        out = _layer_norm(z, gamma_ref[...].astype(jnp.float32),
                          beta_ref[...].astype(jnp.float32))
        out_ref[...] = out.astype(out_ref.dtype)


# ---------------------------------------------------------------------------
# Wrapper
# ---------------------------------------------------------------------------
def mlp_block(x, w1, b1, w2, b2, gamma, beta, *,
              row_tile=512, h_tile=512,
              mxu_dtype=jnp.bfloat16, force_h_split=False):
    """x: (batch, seq, dim). w1: (dim, hidden), w2: (hidden, dim).

    Weights are stored (in_dim, out_dim), i.e. the transpose of PyTorch's
    (out, in) nn.Linear layout.
    """
    B, S, D = x.shape
    H = w1.shape[1]
    R = B * S
    x2 = x.reshape(R, D)

    # Narrow MXU operands (bf16 by default); accumulation stays f32 in-kernel.
    if mxu_dtype is not None and w1.dtype != mxu_dtype:
        w1 = w1.astype(mxu_dtype)
        w2 = w2.astype(mxu_dtype)
    w_itemsize = jnp.dtype(w1.dtype).itemsize
    x_itemsize = jnp.dtype(x.dtype).itemsize

    # Row tile: dtype-aware sublane multiple, 256-aligned when big, and
    # guarantee >= 2 row-grid steps so both v7x TensorCores get work.
    sub = _sublane(x.dtype)
    TR = min(row_tile, _round_up(R, sub))
    if R > sub and pl.cdiv(R, TR) < 2:
        TR = _round_up(pl.cdiv(R, 2), sub)
    if TR >= 256:
        TR = (TR // 256) * 256
    R_pad = _round_up(R, TR)
    if R_pad != R:
        x2 = jnp.pad(x2, ((0, R_pad - R), (0, 0)))
    n_row = R_pad // TR

    # Generation-aware VMEM budget (~80% of physical per-core VMEM).
    try:
        vmem_cap = int(pltpu.get_tpu_info().vmem_capacity_bytes)
    except Exception:
        vmem_cap = 64 * 1024 * 1024
    budget = int(0.80 * vmem_cap)

    def fused_vmem(weight_bufs):
        wbytes = (D * H + H * D) * w_itemsize * weight_bufs
        small = (H + 3 * D) * 4
        tiles = 2 * 2 * TR * D * x_itemsize            # dbl-buffered x / out
        interm = TR * H * 4 + 4 * TR * D * 4           # f32 GELU + LN temps
        return int((wbytes + small + tiles + interm) * 1.25)   # 25% headroom

    use_hsplit = force_h_split or fused_vmem(1) > budget

    cost = pl.CostEstimate(
        flops=4 * R * D * H,                           # two matmuls
        transcendentals=R * H,                         # erf in GELU
        bytes_accessed=int(2 * R * D * x_itemsize
                           + 2 * D * H * w_itemsize + (H + 3 * D) * 4),
    )

    b1_2 = b1.reshape(1, H)
    b2_2 = b2.reshape(1, D)
    gamma2 = gamma.reshape(1, D)
    beta2 = beta.reshape(1, D)

    def const_spec(shape, index_map, single):
        # Grid-invariant operand: single-buffered when supported.
        if single:
            return pl.BlockSpec(shape, index_map, pipeline_mode=pl.Buffered(1))
        return pl.BlockSpec(shape, index_map)

    if not use_hsplit:
        def run(single_buffer_consts):
            wbufs = 1 if single_buffer_consts else 2
            vmem_limit = min(budget, max(fused_vmem(wbufs), 4 * 1024 * 1024))
            return pl.pallas_call(
                _mlp_fused_kernel,
                out_shape=jax.ShapeDtypeStruct((R_pad, D), x.dtype),
                grid_spec=pltpu.PrefetchScalarGridSpec(
                    num_scalar_prefetch=0,
                    grid=(n_row,),
                    in_specs=[
                        pl.BlockSpec((TR, D), lambda i: (i, 0)),    # x tile
                        const_spec((D, H), lambda i: (0, 0), single_buffer_consts),
                        const_spec((1, H), lambda i: (0, 0), single_buffer_consts),
                        const_spec((H, D), lambda i: (0, 0), single_buffer_consts),
                        const_spec((1, D), lambda i: (0, 0), single_buffer_consts),
                        const_spec((1, D), lambda i: (0, 0), single_buffer_consts),
                        const_spec((1, D), lambda i: (0, 0), single_buffer_consts),
                    ],
                    out_specs=pl.BlockSpec((TR, D), lambda i: (i, 0)),
                ),
                compiler_params=pltpu.CompilerParams(
                    dimension_semantics=("parallel",),
                    vmem_limit_bytes=int(vmem_limit),
                ),
                cost_estimate=cost,
            )(x2, w1, b1_2, w2, b2_2, gamma2, beta2)

        try:
            out2 = run(True)
        except Exception:
            out2 = run(False)     # fallback: default (double) buffering
        return out2[:R].reshape(B, S, D)

    # ------------------ H-split path (weights streamed over hidden dim) -----
    TH = _round_up(min(h_tile, _round_up(H, 128)), 128)

    def hsplit_vmem(th):
        wblk = 2 * 2 * D * th * w_itemsize             # dbl-buffered w blocks
        small = 2 * 2 * th * 4 + 3 * D * 4
        tiles = 2 * 2 * TR * D * x_itemsize
        acc = TR * D * 4
        interm = TR * th * 4 + 3 * TR * D * 4
        return int((wblk + small + tiles + acc + interm) * 1.25)

    while hsplit_vmem(TH) > budget and TH > 128:
        TH = max(128, (TH // 2 // 128) * 128)

    H_pad = _round_up(H, TH)
    if H_pad != H:
        # Zero-padding the hidden dim is semantics-preserving: padded w2 rows
        # are zero, so the extra GELU columns contribute nothing.
        w1 = jnp.pad(w1, ((0, 0), (0, H_pad - H)))
        w2 = jnp.pad(w2, ((0, H_pad - H), (0, 0)))
        b1_2 = jnp.pad(b1_2, ((0, 0), (0, H_pad - H)))
    n_h = H_pad // TH
    vmem_limit = min(budget, max(hsplit_vmem(TH), 4 * 1024 * 1024))

    def run(single_buffer_consts):
        return pl.pallas_call(
            _mlp_hsplit_kernel,
            out_shape=jax.ShapeDtypeStruct((R_pad, D), x.dtype),
            grid_spec=pltpu.PrefetchScalarGridSpec(
                num_scalar_prefetch=0,
                grid=(n_row, n_h),
                in_specs=[
                    pl.BlockSpec((TR, D), lambda i, k: (i, 0)),   # x (resident over k)
                    pl.BlockSpec((D, TH), lambda i, k: (0, k)),   # w1 block (streamed)
                    pl.BlockSpec((1, TH), lambda i, k: (0, k)),   # b1 block
                    pl.BlockSpec((TH, D), lambda i, k: (k, 0)),   # w2 block (streamed)
                    const_spec((1, D), lambda i, k: (0, 0), single_buffer_consts),
                    const_spec((1, D), lambda i, k: (0, 0), single_buffer_consts),
                    const_spec((1, D), lambda i, k: (0, 0), single_buffer_consts),
                ],
                out_specs=pl.BlockSpec((TR, D), lambda i, k: (i, 0)),
                scratch_shapes=[pltpu.VMEM((TR, D), jnp.float32)],
            ),
            compiler_params=pltpu.CompilerParams(
                dimension_semantics=("parallel", "arbitrary"),
                vmem_limit_bytes=int(vmem_limit),
            ),
            cost_estimate=cost,
        )(x2, w1, b1_2, w2, b2_2, gamma2, beta2)

    try:
        out2 = run(True)
    except Exception:
        out2 = run(False)
    return out2[:R].reshape(B, S, D)


# ---------------------------------------------------------------------------
# Reference
# ---------------------------------------------------------------------------
def reference(x, w1, b1, w2, b2, gamma, beta):
    h = jnp.einsum("bsd,dh->bsh", x, w1) + b1
    h = jax.nn.gelu(h, approximate=False)
    y = jnp.einsum("bsh,hd->bsd", h, w2) + b2
    z = x + y
    mean = jnp.mean(z, axis=-1, keepdims=True)
    var = jnp.mean((z - mean) ** 2, axis=-1, keepdims=True)
    return (z - mean) * jax.lax.rsqrt(var + LN_EPS) * gamma + beta


if __name__ == "__main__":
    B, S, D, Hd = 2, 8, 128, 256
    key = jax.random.PRNGKey(0)
    kx, k1, k2, k3, k4 = jax.random.split(key, 5)

    x = jax.random.normal(kx, (B, S, D), dtype=jnp.float32)
    # Weights stored (in_dim, out_dim): transpose of PyTorch's (out, in) layout.
    w1 = jax.random.normal(k1, (D, Hd), dtype=jnp.float32) * (1.0 / jnp.sqrt(D))
    b1 = jax.random.normal(k2, (Hd,), dtype=jnp.float32) * 0.01
    w2 = jax.random.normal(k3, (Hd, D), dtype=jnp.float32) * (1.0 / jnp.sqrt(Hd))
    b2 = jax.random.normal(k4, (D,), dtype=jnp.float32) * 0.01
    gamma = jnp.ones((D,), dtype=jnp.float32)
    beta = jnp.zeros((D,), dtype=jnp.float32)

    ref = reference(x, w1, b1, w2, b2, gamma, beta)

    # Fused (resident-weights) path — bf16 MXU operands, f32 accumulation.
    out = jax.block_until_ready(mlp_block(x, w1, b1, w2, b2, gamma, beta))
    assert out.shape == (B, S, D)
    assert jnp.allclose(out, ref, atol=3e-2, rtol=3e-2), \
        float(jnp.max(jnp.abs(out - ref)))

    # H-split path (exercised explicitly here; auto-selected on v7x when the
    # resident weight set exceeds the VMEM budget).
    out_hs = jax.block_until_ready(
        mlp_block(x, w1, b1, w2, b2, gamma, beta,
                  force_h_split=True, h_tile=128))
    assert jnp.allclose(out_hs, ref, atol=3e-2, rtol=3e-2), \
        float(jnp.max(jnp.abs(out_hs - ref)))

    print("KERNEL_OK")
</pallas_src>

<mosaic_0001>
module attributes {stable_mosaic.version = 11 : i64} {
  func.func @_mlp_fused_kernel(%arg0: i32, %arg1: memref<8x128xf32, #tpu.memory_space<vmem>>, %arg2: memref<128x256xbf16, #tpu.memory_space<vmem>>, %arg3: memref<1x256xf32, #tpu.memory_space<vmem>>, %arg4: memref<256x128xbf16, #tpu.memory_space<vmem>>, %arg5: memref<1x128xf32, #tpu.memory_space<vmem>>, %arg6: memref<1x128xf32, #tpu.memory_space<vmem>>, %arg7: memref<1x128xf32, #tpu.memory_space<vmem>>, %arg8: memref<8x128xf32, #tpu.memory_space<vmem>>) attributes {dimension_semantics = [#tpu.dimension_semantics<parallel>], iteration_bounds = array<i64: 2>, scalar_prefetch = 0 : i64, scratch_operands = 0 : i64, tpu.core_type = #tpu.core_type<tc>, window_params = [{transform_indices = @transform_0, window_bounds = array<i64: 8, 128>}, {pipeline_mode = #tpu.pipeline_mode<synchronous>, transform_indices = @transform_1, window_bounds = array<i64: 128, 256>}, {pipeline_mode = #tpu.pipeline_mode<synchronous>, transform_indices = @transform_2, window_bounds = array<i64: 1, 256>}, {pipeline_mode = #tpu.pipeline_mode<synchronous>, transform_indices = @transform_3, window_bounds = array<i64: 256, 128>}, {pipeline_mode = #tpu.pipeline_mode<synchronous>, transform_indices = @transform_4, window_bounds = array<i64: 1, 128>}, {pipeline_mode = #tpu.pipeline_mode<synchronous>, transform_indices = @transform_5, window_bounds = array<i64: 1, 128>}, {pipeline_mode = #tpu.pipeline_mode<synchronous>, transform_indices = @transform_6, window_bounds = array<i64: 1, 128>}, {transform_indices = @transform_7, window_bounds = array<i64: 8, 128>}]} {
    %c0 = arith.constant 0 : index
    %c0_0 = arith.constant 0 : index
    %0 = vector.load %arg1[%c0, %c0_0] : memref<8x128xf32, #tpu.memory_space<vmem>>, vector<8x128xf32>
    %1 = arith.truncf %0 : vector<8x128xf32> to vector<8x128xbf16>
    %c0_1 = arith.constant 0 : index
    %c0_2 = arith.constant 0 : index
    %2 = vector.load %arg2[%c0_1, %c0_2] : memref<128x256xbf16, #tpu.memory_space<vmem>>, vector<128x256xbf16>
    %cst = arith.constant dense<0.000000e+00> : vector<8x256xf32>
    %3 = tpu.matmul %1, %2, %cst {dimension_numbers = #tpu.dot_dimension_numbers<[1], [0], [0], [1], [0, 0, 1, 1], [], []>} : vector<8x128xbf16>, vector<128x256xbf16>, vector<8x256xf32> -> vector<8x256xf32>
    %c0_3 = arith.constant 0 : index
    %c0_4 = arith.constant 0 : index
    %4 = vector.load %arg3[%c0_3, %c0_4] : memref<1x256xf32, #tpu.memory_space<vmem>>, vector<1x256xf32>
    %5 = vector.broadcast %4 : vector<1x256xf32> to vector<8x256xf32>
    %6 = arith.addf %3, %5 : vector<8x256xf32>
    %cst_5 = arith.constant 5.000000e-01 : f32
    %7 = vector.broadcast %cst_5 : f32 to vector<8x256xf32>
    %8 = arith.mulf %7, %6 : vector<8x256xf32>
    %cst_6 = arith.constant 0.707106769 : f32
    %9 = vector.broadcast %cst_6 : f32 to vector<8x256xf32>
    %10 = arith.mulf %6, %9 : vector<8x256xf32>
    %11 = math.erf %10 : vector<8x256xf32>
    %cst_7 = arith.constant 1.000000e+00 : f32
    %12 = vector.broadcast %cst_7 : f32 to vector<8x256xf32>
    %13 = arith.addf %12, %11 : vector<8x256xf32>
    %14 = arith.mulf %8, %13 : vector<8x256xf32>
    %15 = arith.truncf %14 : vector<8x256xf32> to vector<8x256xbf16>
    %c0_8 = arith.constant 0 : index
    %c0_9 = arith.constant 0 : index
    %16 = vector.load %arg4[%c0_8, %c0_9] : memref<256x128xbf16, #tpu.memory_space<vmem>>, vector<256x128xbf16>
    %cst_10 = arith.constant dense<0.000000e+00> : vector<8x128xf32>
    %17 = tpu.matmul %15, %16, %cst_10 {dimension_numbers = #tpu.dot_dimension_numbers<[1], [0], [0], [1], [0, 0, 1, 1], [], []>} : vector<8x256xbf16>, vector<256x128xbf16>, vector<8x128xf32> -> vector<8x128xf32>
    %c0_11 = arith.constant 0 : index
    %c0_12 = arith.constant 0 : index
    %18 = vector.load %arg5[%c0_11, %c0_12] : memref<1x128xf32, #tpu.memory_space<vmem>>, vector<1x128xf32>
    %19 = vector.broadcast %18 : vector<1x128xf32> to vector<8x128xf32>
    %20 = arith.addf %17, %19 : vector<8x128xf32>
    %21 = arith.addf %0, %20 : vector<8x128xf32>
    %c0_13 = arith.constant 0 : index
    %c0_14 = arith.constant 0 : index
    %22 = vector.load %arg6[%c0_13, %c0_14] : memref<1x128xf32, #tpu.memory_space<vmem>>, vector<1x128xf32>
    %c0_15 = arith.constant 0 : index
    %c0_16 = arith.constant 0 : index
    %23 = vector.load %arg7[%c0_15, %c0_16] : memref<1x128xf32, #tpu.memory_space<vmem>>, vector<1x128xf32>
    %cst_17 = arith.constant dense<0.000000e+00> : vector<8xf32>
    %24 = vector.multi_reduction <add>, %21, %cst_17 [1] : vector<8x128xf32> to vector<8xf32>
    %25 = vector.shape_cast %24 : vector<8xf32> to vector<8x1xf32>
    %cst_18 = arith.constant 1.280000e+02 : f32
    %26 = vector.broadcast %cst_18 : f32 to vector<8x1xf32>
    %27 = arith.divf %25, %26 : vector<8x1xf32>
    %28 = arith.mulf %21, %21 : vector<8x128xf32>
    %cst_19 = arith.constant dense<0.000000e+00> : vector<8xf32>
    %29 = vector.multi_reduction <add>, %28, %cst_19 [1] : vector<8x128xf32> to vector<8xf32>
    %30 = vector.shape_cast %29 : vector<8xf32> to vector<8x1xf32>
    %cst_20 = arith.constant 1.280000e+02 : f32
    %31 = vector.broadcast %cst_20 : f32 to vector<8x1xf32>
    %32 = arith.divf %30, %31 : vector<8x1xf32>
    %33 = arith.mulf %27, %27 : vector<8x1xf32>
    %34 = arith.subf %32, %33 : vector<8x1xf32>
    %35 = vector.broadcast %27 : vector<8x1xf32> to vector<8x128xf32>
    %36 = arith.subf %21, %35 : vector<8x128xf32>
    %cst_21 = arith.constant 9.99999974E-6 : f32
    %37 = vector.broadcast %cst_21 : f32 to vector<8x1xf32>
    %38 = arith.addf %34, %37 : vector<8x1xf32>
    %39 = math.rsqrt %38 : vector<8x1xf32>
    %40 = vector.broadcast %39 : vector<8x1xf32> to vector<8x128xf32>
    %41 = arith.mulf %36, %40 : vector<8x128xf32>
    %42 = vector.broadcast %22 : vector<1x128xf32> to vector<8x128xf32>
    %43 = arith.mulf %41, %42 : vector<8x128xf32>
    %44 = vector.broadcast %23 : vector<1x128xf32> to vector<8x128xf32>
    %45 = arith.addf %43, %44 : vector<8x128xf32>
    %c0_22 = arith.constant 0 : index
    %c0_23 = arith.constant 0 : index
    %46 = vector.load %arg8[%c0_22, %c0_23] : memref<8x128xf32, #tpu.memory_space<vmem>>, vector<8x128xf32>
    tpu.vector_store %arg8[%c0_22, %c0_23], %45 {strides = array<i32>} : memref<8x128xf32, #tpu.memory_space<vmem>>, vector<8x128xf32>,
    return
  }
  func.func @transform_0(%arg0: i32) -> (i32, i32) {
    %c0_i32 = arith.constant 0 : i32
    %c0_i32_0 = arith.constant 0 : i32
    return %arg0, %c0_i32 : i32, i32
  }
  func.func @transform_1(%arg0: i32) -> (i32, i32) {
    %c0_i32 = arith.constant 0 : i32
    %c0_i32_0 = arith.constant 0 : i32
    %c0_i32_1 = arith.constant 0 : i32
    return %c0_i32, %c0_i32_0 : i32, i32
  }
  func.func @transform_2(%arg0: i32) -> (i32, i32) {
    %c0_i32 = arith.constant 0 : i32
    %c0_i32_0 = arith.constant 0 : i32
    %c0_i32_1 = arith.constant 0 : i32
    return %c0_i32, %c0_i32_0 : i32, i32
  }
  func.func @transform_3(%arg0: i32) -> (i32, i32) {
    %c0_i32 = arith.constant 0 : i32
    %c0_i32_0 = arith.constant 0 : i32
    %c0_i32_1 = arith.constant 0 : i32
    return %c0_i32, %c0_i32_0 : i32, i32
  }
  func.func @transform_4(%arg0: i32) -> (i32, i32) {
    %c0_i32 = arith.constant 0 : i32
    %c0_i32_0 = arith.constant 0 : i32
    %c0_i32_1 = arith.constant 0 : i32
    return %c0_i32, %c0_i32_0 : i32, i32
  }
  func.func @transform_5(%arg0: i32) -> (i32, i32) {
    %c0_i32 = arith.constant 0 : i32
    %c0_i32_0 = arith.constant 0 : i32
    %c0_i32_1 = arith.constant 0 : i32
    return %c0_i32, %c0_i32_0 : i32, i32
  }
  func.func @transform_6(%arg0: i32) -> (i32, i32) {
    %c0_i32 = arith.constant 0 : i32
    %c0_i32_0 = arith.constant 0 : i32
    %c0_i32_1 = arith.constant 0 : i32
    return %c0_i32, %c0_i32_0 : i32, i32
  }
  func.func @transform_7(%arg0: i32) -> (i32, i32) {
    %c0_i32 = arith.constant 0 : i32
    %c0_i32_0 = arith.constant 0 : i32
    return %arg0, %c0_i32 : i32, i32
  }
}

module attributes {stable_mosaic.version = 11 : i64} {
  func.func @_mlp_fused_kernel(%arg0: i32, %arg1: memref<8x128xf32, #tpu.memory_space<vmem>>, %arg2: memref<128x256xbf16, #tpu.memory_space<vmem>>, %arg3: memref<1x256xf32, #tpu.memory_space<vmem>>, %arg4: memref<256x128xbf16, #tpu.memory_space<vmem>>, %arg5: memref<1x128xf32, #tpu.memory_space<vmem>>, %arg6: memref<1x128xf32, #tpu.memory_space<vmem>>, %arg7: memref<1x128xf32, #tpu.memory_space<vmem>>, %arg8: memref<8x128xf32, #tpu.memory_space<vmem>>) attributes {dimension_semantics = [#tpu.dimension_semantics<parallel>], iteration_bounds = array<i64: 2>, scalar_prefetch = 0 : i64, scratch_operands = 0 : i64, tpu.core_type = #tpu.core_type<tc>, window_params = [{transform_indices = @transform_0, window_bounds = array<i64: 8, 128>}, {pipeline_mode = #tpu.pipeline_mode<synchronous>, transform_indices = @transform_1, window_bounds = array<i64: 128, 256>}, {pipeline_mode = #tpu.pipeline_mode<synchronous>, transform_indices = @transform_2, window_bounds = array<i64: 1, 256>}, {pipeline_mode = #tpu.pipeline_mode<synchronous>, transform_indices = @transform_3, window_bounds = array<i64: 256, 128>}, {pipeline_mode = #tpu.pipeline_mode<synchronous>, transform_indices = @transform_4, window_bounds = array<i64: 1, 128>}, {pipeline_mode = #tpu.pipeline_mode<synchronous>, transform_indices = @transform_5, window_bounds = array<i64: 1, 128>}, {pipeline_mode = #tpu.pipeline_mode<synchronous>, transform_indices = @transform_6, window_bounds = array<i64: 1, 128>}, {transform_indices = @transform_7, window_bounds = array<i64: 8, 128>}]} {
    %c0 = arith.constant 0 : index
    %c0_0 = arith.constant 0 : index
    %0 = vector.load %arg1[%c0, %c0_0] : memref<8x128xf32, #tpu.memory_space<vmem>>, vector<8x128xf32>
    %1 = arith.truncf %0 : vector<8x128xf32> to vector<8x128xbf16>
    %c0_1 = arith.constant 0 : index
    %c0_2 = arith.constant 0 : index
    %2 = vector.load %arg2[%c0_1, %c0_2] : memref<128x256xbf16, #tpu.memory_space<vmem>>, vector<128x256xbf16>
    %cst = arith.constant dense<0.000000e+00> : vector<8x256xf32>
    %3 = tpu.matmul %1, %2, %cst {dimension_numbers = #tpu.dot_dimension_numbers<[1], [0], [0], [1], [0, 0, 1, 1], [], []>} : vector<8x128xbf16>, vector<128x256xbf16>, vector<8x256xf32> -> vector<8x256xf32>
    %c0_3 = arith.constant 0 : index
    %c0_4 = arith.constant 0 : index
    %4 = vector.load %arg3[%c0_3, %c0_4] : memref<1x256xf32, #tpu.memory_space<vmem>>, vector<1x256xf32>
    %5 = vector.broadcast %4 : vector<1x256xf32> to vector<8x256xf32>
    %6 = arith.addf %3, %5 : vector<8x256xf32>
    %cst_5 = arith.constant 5.000000e-01 : f32
    %7 = vector.broadcast %cst_5 : f32 to vector<8x256xf32>
    %8 = arith.mulf %7, %6 : vector<8x256xf32>
    %cst_6 = arith.constant 0.707106769 : f32
    %9 = vector.broadcast %cst_6 : f32 to vector<8x256xf32>
    %10 = arith.mulf %6, %9 : vector<8x256xf32>
    %11 = math.erf %10 : vector<8x256xf32>
    %cst_7 = arith.constant 1.000000e+00 : f32
    %12 = vector.broadcast %cst_7 : f32 to vector<8x256xf32>
    %13 = arith.addf %12, %11 : vector<8x256xf32>
    %14 = arith.mulf %8, %13 : vector<8x256xf32>
    %15 = arith.truncf %14 : vector<8x256xf32> to vector<8x256xbf16>
    %c0_8 = arith.constant 0 : index
    %c0_9 = arith.constant 0 : index
    %16 = vector.load %arg4[%c0_8, %c0_9] : memref<256x128xbf16, #tpu.memory_space<vmem>>, vector<256x128xbf16>
    %cst_10 = arith.constant dense<0.000000e+00> : vector<8x128xf32>
    %17 = tpu.matmul %15, %16, %cst_10 {dimension_numbers = #tpu.dot_dimension_numbers<[1], [0], [0], [1], [0, 0, 1, 1], [], []>} : vector<8x256xbf16>, vector<256x128xbf16>, vector<8x128xf32> -> vector<8x128xf32>
    %c0_11 = arith.constant 0 : index
    %c0_12 = arith.constant 0 : index
    %18 = vector.load %arg5[%c0_11, %c0_12] : memref<1x128xf32, #tpu.memory_space<vmem>>, vector<1x128xf32>
    %19 = vector.broadcast %18 : vector<1x128xf32> to vector<8x128xf32>
    %20 = arith.addf %17, %19 : vector<8x128xf32>
    %21 = arith.addf %0, %20 : vector<8x128xf32>
    %c0_13 = arith.constant 0 : index
    %c0_14 = arith.constant 0 : index
    %22 = vector.load %arg6[%c0_13, %c0_14] : memref<1x128xf32, #tpu.memory_space<vmem>>, vector<1x128xf32>
    %c0_15 = arith.constant 0 : index
    %c0_16 = arith.constant 0 : index
    %23 = vector.load %arg7[%c0_15, %c0_16] : memref<1x128xf32, #tpu.memory_space<vmem>>, vector<1x128xf32>
    %cst_17 = arith.constant dense<0.000000e+00> : vector<8xf32>
    %24 = vector.multi_reduction <add>, %21, %cst_17 [1] : vector<8x128xf32> to vector<8xf32>
    %25 = vector.shape_cast %24 : vector<8xf32> to vector<8x1xf32>
    %cst_18 = arith.constant 1.280000e+02 : f32
    %26 = vector.broadcast %cst_18 : f32 to vector<8x1xf32>
    %27 = arith.divf %25, %26 : vector<8x1xf32>
    %28 = arith.mulf %21, %21 : vector<8x128xf32>
    %cst_19 = arith.constant dense<0.000000e+00> : vector<8xf32>
    %29 = vector.multi_reduction <add>, %28, %cst_19 [1] : vector<8x128xf32> to vector<8xf32>
    %30 = vector.shape_cast %29 : vector<8xf32> to vector<8x1xf32>
    %cst_20 = arith.constant 1.280000e+02 : f32
    %31 = vector.broadcast %cst_20 : f32 to vector<8x1xf32>
    %32 = arith.divf %30, %31 : vector<8x1xf32>
    %33 = arith.mulf %27, %27 : vector<8x1xf32>
    %34 = arith.subf %32, %33 : vector<8x1xf32>
    %35 = vector.broadcast %27 : vector<8x1xf32> to vector<8x128xf32>
    %36 = arith.subf %21, %35 : vector<8x128xf32>
    %cst_21 = arith.constant 9.99999974E-6 : f32
    %37 = vector.broadcast %cst_21 : f32 to vector<8x1xf32>
    %38 = arith.addf %34, %37 : vector<8x1xf32>
    %39 = math.rsqrt %38 : vector<8x1xf32>
    %40 = vector.broadcast %39 : vector<8x1xf32> to vector<8x128xf32>
    %41 = arith.mulf %36, %40 : vector<8x128xf32>
    %42 = vector.broadcast %22 : vector<1x128xf32> to vector<8x128xf32>
    %43 = arith.mulf %41, %42 : vector<8x128xf32>
    %44 = vector.broadcast %23 : vector<1x128xf32> to vector<8x128xf32>
    %45 = arith.addf %43, %44 : vector<8x128xf32>
    %c0_22 = arith.constant 0 : index
    %c0_23 = arith.constant 0 : index
    %46 = vector.load %arg8[%c0_22, %c0_23] : memref<8x128xf32, #tpu.memory_space<vmem>>, vector<8x128xf32>
    tpu.vector_store %arg8[%c0_22, %c0_23], %45 {strides = array<i32>} : memref<8x128xf32, #tpu.memory_space<vmem>>, vector<8x128xf32>,
    return
  }
  func.func @transform_0(%arg0: i32) -> (i32, i32) {
    %c0_i32 = arith.constant 0 : i32
    %c0_i32_0 = arith.constant 0 : i32
    return %arg0, %c0_i32 : i32, i32
  }
  func.func @transform_1(%arg0: i32) -> (i32, i32) {
    %c0_i32 = arith.constant 0 : i32
    %c0_i32_0 = arith.constant 0 : i32
    %c0_i32_1 = arith.constant 0 : i32
    return %c0_i32, %c0_i32_0 : i32, i32
  }
  func.func @transform_2(%arg0: i32) -> (i32, i32) {
    %c0_i32 = arith.constant 0 : i32
    %c0_i32_0 = arith.constant 0 : i32
    %c0_i32_1 = arith.constant 0 : i32
    return %c0_i32, %c0_i32_0 : i32, i32
  }
  func.func @transform_3(%arg0: i32) -> (i32, i32) {
    %c0_i32 = arith.constant 0 : i32
    %c0_i32_0 = arith.constant 0 : i32
    %c0_i32_1 = arith.constant 0 : i32
    return %c0_i32, %c0_i32_0 : i32, i32
  }
  func.func @transform_4(%arg0: i32) -> (i32, i32) {
    %c0_i32 = arith.constant 0 : i32
    %c0_i32_0 = arith.constant 0 : i32
    %c0_i32_1 = arith.constant 0 : i32
    return %c0_i32, %c0_i32_0 : i32, i32
  }
  func.func @transform_5(%arg0: i32) -> (i32, i32) {
    %c0_i32 = arith.constant 0 : i32
    %c0_i32_0 = arith.constant 0 : i32
    %c0_i32_1 = arith.constant 0 : i32
    return %c0_i32, %c0_i32_0 : i32, i32
  }
  func.func @transform_6(%arg0: i32) -> (i32, i32) {
    %c0_i32 = arith.constant 0 : i32
    %c0_i32_0 = arith.constant 0 : i32
    %c0_i32_1 = arith.constant 0 : i32
    return %c0_i32, %c0_i32_0 : i32, i32
  }
  func.func @transform_7(%arg0: i32) -> (i32, i32) {
    %c0_i32 = arith.constant 0 : i32
    %c0_i32_0 = arith.constant 0 : i32
    return %arg0, %c0_i32 : i32, i32
  }
}

</mosaic_0001>

<llo_original>
// kernel: tpu_custom_call.1
$region0: #{tpu_custom_call.1}
  #allocation0 [shape = 'u32[]', space=smem, size = 0x4, offset = 0x4, fixed_abs, tag = 'smem constant byte address 0x4 - core index']
  #allocation1 [shape = 'u32[144,128]{1,0:T(1,128)}', space=vmem, size = 0x12000, scoped, tag = 'internal scratch']
  %s0 = inlined_call_operand.hbm [shape: f32[16,128], index: 0, kind: input, shape index: {}]
  %s1 = inlined_call_operand.hbm [shape: bf16[128,256], index: 1, kind: input, shape index: {}]
  %s2 = inlined_call_operand.vmem [shape: f32[1,256], index: 2, kind: input, shape index: {}]
  %s3 = inlined_call_operand.hbm [shape: bf16[256,128], index: 3, kind: input, shape index: {}]
  %s4 = inlined_call_operand.vmem [shape: f32[1,128], index: 4, kind: input, shape index: {}]
  %s5 = inlined_call_operand.vmem [shape: f32[1,128], index: 5, kind: input, shape index: {}]
  %s6 = inlined_call_operand.vmem [shape: f32[1,128], index: 6, kind: input, shape index: {}]
  %s7 = inlined_call_operand.hbm [shape: f32[16,128], index: 7, kind: output, shape index: {}]
  %s8 = sld [smem:[#allocation0]]
  $region73: #{tpu_custom_call.1} parent=0
    _
  %s10 = ssub.s32 1, %s8
  %s11 = scalar_select 0, %s10, %s8
  $region1: #{tpu_custom_call.1} parent=0
    #allocation2 [shape = 'u8[8192]{0}', space=vmem, size = 0x2000, scoped, tag = 'input window, operand 0']
    #allocation3 [shape = 's32[2]{0}', space=sflag, size = 0x8, scoped, tag = 'scoped memory for tpu_custom_call.1']
    #allocation4 [shape = 's32[2]{0}', space=sflag, size = 0x8, scoped, tag = 'scoped memory for tpu_custom_call.1']
    #allocation5 [shape = 'u8[65536]{0}', space=vmem, size = 0x10000, scoped, tag = 'input window, operand 1, single buffered']
    #allocation6 [shape = 's32[1]{0}', space=sflag, size = 0x4, scoped, tag = 'scoped memory for tpu_custom_call.1']
    #allocation7 [shape = 'u8[65536]{0}', space=vmem, size = 0x10000, scoped, tag = 'input window, operand 3, single buffered']
    #allocation8 [shape = 'u8[8192]{0}', space=vmem, size = 0x2000, scoped, tag = 'output window, operand 0']
    %12 = vsyncpa [#allocation3], 0
    %s13 = scalar_lea.sflag [#allocation3], 1
    %14 = vsyncpa %s13, 0
    %15 = vsyncpa [#allocation6], 0
    %16 = vsyncpa [#allocation4], 0
    %s17 = scalar_lea.sflag [#allocation4], 1
    %18 = vsyncpa %s17, 0
    loop: start=0, step=1, limit=4
    $region2: #{tpu_custom_call.1} parent=1 // loop_pre_header
      _
    $region3: #{tpu_custom_call.1} parent=1 // loop_header
      %s20 = sphi 0, %s24
      %p21 = scmp.ge.s32.totalorder %s20, 4
      %s30 = sphi 0, %s32
      %s33 = sphi 0, %s30
      %s34 = sphi 0, %s33
      %s50 = sphi 0, %s34
      %s54 = sphi 0, %s54
      %s56 = sphi 0, %s54
      %s57 = sphi 0, %s56
      %s71 = sphi 0, %s57
      %s75 = sphi 0, %s75
      %s77 = sphi 0, %s75
      %s78 = sphi 0, %s77
      %s92 = sphi 0, %s78
      %s96 = sphi 0, %s96
      %s98 = sphi 0, %s96
      %s99 = sphi 0, %s98
      %s113 = sphi 0, %s99
      %s117 = sphi 0, %s117
      %s119 = sphi 0, %s117
      %s120 = sphi 0, %s119
      %s134 = sphi 0, %s120
      %s138 = sphi 0, %s138
      %s140 = sphi 0, %s138
      %s141 = sphi 0, %s140
      %s155 = sphi 0, %s141
      %s159 = sphi 0, %s159
      %s161 = sphi 0, %s159
      %s162 = sphi 0, %s161
      %s176 = sphi 0, %s162
      %s182 = sphi 0, %s184
      %s185 = sphi 0, %s182
      %s186 = sphi 0, %s185
      %s202 = sphi 0, %s186
    $region4: #{tpu_custom_call.1} parent=1 // loop_header_branch
      %23 = sbr.rel (%p21) target = $region8
    $region5: #{tpu_custom_call.1} parent=1 // loop_body
      %s25 = ssub.s32 %s20, 1
      %s26 = ssub.s32 %s20, 2
      %s27 = sadd.s32 %s20, 1
      %s28 = ssub.s32 %s20, %s27
      %p29 = scmp.eq.s32.totalorder %s28, 0
      %s31 = sadd.s32 %s30, 1
      %s32 = scalar_select %p29, %s30, %s31
      %p35 = pneg %p29
      %p36 = scmp.eq.s32.totalorder %s20, 1
      %p37 = por %p35, %p36
      %p38 = scmp.ne.s32.totalorder %s30, %s33
      %p39 = scmp.eq.s32.totalorder %s20, 0
      %p40 = por %p38, %p39
      %p41 = scmp.ne.s32.totalorder %s30, %s33
      %p42 = scmp.eq.s32.totalorder %s25, 1
      %p43 = por %p41, %p42
      %p44 = scmp.ne.s32.totalorder %s33, %s34
      %p45 = scmp.eq.s32.totalorder %s25, 0
      %p46 = por %p44, %p45
      %p47 = scmp.ne.s32.totalorder %s33, %s34
      %p48 = scmp.eq.s32.totalorder %s26, 1
      %p49 = por %p47, %p48
      %p51 = scmp.ne.s32.totalorder %s34, %s50
      %p52 = scmp.eq.s32.totalorder %s26, 0
      %p53 = por %p51, %p52
      %s55 = sadd.s32 %s54, 1
      %p58 = scmp.eq.s32.totalorder %s20, 1
      %p59 = scmp.ne.s32.totalorder %s54, %s56
      %p60 = scmp.eq.s32.totalorder %s20, 0
      %p61 = por %p59, %p60
      %p62 = scmp.ne.s32.totalorder %s54, %s56
      %p63 = scmp.eq.s32.totalorder %s25, 1
      %p64 = por %p62, %p63
      %p65 = scmp.ne.s32.totalorder %s56, %s57
      %p66 = scmp.eq.s32.totalorder %s25, 0
      %p67 = por %p65, %p66
      %p68 = scmp.ne.s32.totalorder %s56, %s57
      %p69 = scmp.eq.s32.totalorder %s26, 1
      %p70 = por %p68, %p69
      %p72 = scmp.ne.s32.totalorder %s57, %s71
      %p73 = scmp.eq.s32.totalorder %s26, 0
      %p74 = por %p72, %p73
      %s76 = sadd.s32 %s75, 1
      %p79 = scmp.eq.s32.totalorder %s20, 1
      %p80 = scmp.ne.s32.totalorder %s75, %s77
      %p81 = scmp.eq.s32.totalorder %s20, 0
      %p82 = por %p80, %p81
      %p83 = scmp.ne.s32.totalorder %s75, %s77
      %p84 = scmp.eq.s32.totalorder %s25, 1
      %p85 = por %p83, %p84
      %p86 = scmp.ne.s32.totalorder %s77, %s78
      %p87 = scmp.eq.s32.totalorder %s25, 0
      %p88 = por %p86, %p87
      %p89 = scmp.ne.s32.totalorder %s77, %s78
      %p90 = scmp.eq.s32.totalorder %s26, 1
      %p91 = por %p89, %p90
      %p93 = scmp.ne.s32.totalorder %s78, %s92
      %p94 = scmp.eq.s32.totalorder %s26, 0
      %p95 = por %p93, %p94
      %s97 = sadd.s32 %s96, 1
      %p100 = scmp.eq.s32.totalorder %s20, 1
      %p101 = scmp.ne.s32.totalorder %s96, %s98
      %p102 = scmp.eq.s32.totalorder %s20, 0
      %p103 = por %p101, %p102
      %p104 = scmp.ne.s32.totalorder %s96, %s98
      %p105 = scmp.eq.s32.totalorder %s25, 1
      %p106 = por %p104, %p105
      %p107 = scmp.ne.s32.totalorder %s98, %s99
      %p108 = scmp.eq.s32.totalorder %s25, 0
      %p109 = por %p107, %p108
      %p110 = scmp.ne.s32.totalorder %s98, %s99
      %p111 = scmp.eq.s32.totalorder %s26, 1
      %p112 = por %p110, %p111
      %p114 = scmp.ne.s32.totalorder %s99, %s113
      %p115 = scmp.eq.s32.totalorder %s26, 0
      %p116 = por %p114, %p115
      %s118 = sadd.s32 %s117, 1
      %p121 = scmp.eq.s32.totalorder %s20, 1
      %p122 = scmp.ne.s32.totalorder %s117, %s119
      %p123 = scmp.eq.s32.totalorder %s20, 0
      %p124 = por %p122, %p123
      %p125 = scmp.ne.s32.totalorder %s117, %s119
      %p126 = scmp.eq.s32.totalorder %s25, 1
      %p127 = por %p125, %p126
      %p128 = scmp.ne.s32.totalorder %s119, %s120
      %p129 = scmp.eq.s32.totalorder %s25, 0
      %p130 = por %p128, %p129
      %p131 = scmp.ne.s32.totalorder %s119, %s120
      %p132 = scmp.eq.s32.totalorder %s26, 1
      %p133 = por %p131, %p132
      %p135 = scmp.ne.s32.totalorder %s120, %s134
      %p136 = scmp.eq.s32.totalorder %s26, 0
      %p137 = por %p135, %p136
      %s139 = sadd.s32 %s138, 1
      %p142 = scmp.eq.s32.totalorder %s20, 1
      %p143 = scmp.ne.s32.totalorder %s138, %s140
      %p144 = scmp.eq.s32.totalorder %s20, 0
      %p145 = por %p143, %p144
      %p146 = scmp.ne.s32.totalorder %s138, %s140
      %p147 = scmp.eq.s32.totalorder %s25, 1
      %p148 = por %p146, %p147
      %p149 = scmp.ne.s32.totalorder %s140, %s141
      %p150 = scmp.eq.s32.totalorder %s25, 0
      %p151 = por %p149, %p150
      %p152 = scmp.ne.s32.totalorder %s140, %s141
      %p153 = scmp.eq.s32.totalorder %s26, 1
      %p154 = por %p152, %p153
      %p156 = scmp.ne.s32.totalorder %s141, %s155
      %p157 = scmp.eq.s32.totalorder %s26, 0
      %p158 = por %p156, %p157
      %s160 = sadd.s32 %s159, 1
      %p163 = scmp.eq.s32.totalorder %s20, 1
      %p164 = scmp.ne.s32.totalorder %s159, %s161
      %p165 = scmp.eq.s32.totalorder %s20, 0
      %p166 = por %p164, %p165
      %p167 = scmp.ne.s32.totalorder %s159, %s161
      %p168 = scmp.eq.s32.totalorder %s25, 1
      %p169 = por %p167, %p168
      %p170 = scmp.ne.s32.totalorder %s161, %s162
      %p171 = scmp.eq.s32.totalorder %s25, 0
      %p172 = por %p170, %p171
      %p173 = scmp.ne.s32.totalorder %s161, %s162
      %p174 = scmp.eq.s32.totalorder %s26, 1
      %p175 = por %p173, %p174
      %p177 = scmp.ne.s32.totalorder %s162, %s176
      %p178 = scmp.eq.s32.totalorder %s26, 0
      %p179 = por %p177, %p178
      %s180 = ssub.s32 %s20, %s27
      %p181 = scmp.eq.s32.totalorder %s180, 0
      %s183 = sadd.s32 %s182, 1
      %s184 = scalar_select %p181, %s182, %s183
      %p187 = pneg %p181
      %p188 = scmp.eq.s32.totalorder %s20, 1
      %p189 = por %p187, %p188
      %p190 = scmp.ne.s32.totalorder %s182, %s185
      %p191 = scmp.eq.s32.totalorder %s20, 0
      %p192 = por %p190, %p191
      %p193 = scmp.ne.s32.totalorder %s182, %s185
      %p194 = scmp.eq.s32.totalorder %s25, 1
      %p195 = por %p193, %p194
      %p196 = scmp.ne.s32.totalorder %s185, %s186
      %p197 = scmp.eq.s32.totalorder %s25, 0
      %p198 = por %p196, %p197
      %p199 = scmp.ne.s32.totalorder %s185, %s186
      %p200 = scmp.eq.s32.totalorder %s26, 1
      %p201 = por %p199, %p200
      %p203 = scmp.ne.s32.totalorder %s186, %s202
      %p204 = scmp.eq.s32.totalorder %s26, 0
      %p205 = por %p203, %p204
      %p206 = scmp.le.s32.totalorder 1, %s20
      %p207 = scmp.lt.s32.totalorder %s20, 3
      %p208 = pnand %p206, %p207
      %p209 = pneg %p208
      // Predicated region
      $region9: #{tpu_custom_call.1} parent=5 // pred_check
        _
      $region10: #{tpu_custom_call.1} parent=5 // pred_check_branch
        %211 = sbr.rel (%p208) target = $region12
      $region11: #{tpu_custom_call.1} parent=5 // pred_region
        %s212 = ssub.s32 %s20, 1
        // Predicated region
        $region13: #{tpu_custom_call.1} parent=11 // pred_check
          %p213 = pneg %p67
        $region14: #{tpu_custom_call.1} parent=11 // pred_check_branch
          %215 = sbr.rel (%p213) target = $region16
        $region15: #{tpu_custom_call.1} parent=11 // pred_region
          %s217 = ssub.s32 2048, 2048
          %218 = vsyncadd [#allocation6], %s217
          %s219 = sshll.u32 [#allocation5], 4
          %s220 = int_to_ptr.vmem [resolvable:$true] %s219
          %225 = dma.hbm_to_vmem [thread:$0]  %s1, 2048, %s220, [#allocation6], 128, 128, 8
        $region16: #{tpu_custom_call.1} parent=11 // pred_fallthru
          _
        // Predicated region
        $region17: #{tpu_custom_call.1} parent=11 // pred_check
          %p226 = pneg %p88
        $region18: #{tpu_custom_call.1} parent=11 // pred_check_branch
          %228 = sbr.rel (%p226) target = $region20
        $region19: #{tpu_custom_call.1} parent=11 // pred_region
          _
        $region20: #{tpu_custom_call.1} parent=11 // pred_fallthru
          _
        // Predicated region
        $region21: #{tpu_custom_call.1} parent=11 // pred_check
          %p229 = pneg %p109
        $region22: #{tpu_custom_call.1} parent=11 // pred_check_branch
          %231 = sbr.rel (%p229) target = $region24
        $region23: #{tpu_custom_call.1} parent=11 // pred_region
          %s233 = ssub.s32 2048, 2048
          %234 = vsyncadd [#allocation6], %s233
          %s235 = sshll.u32 [#allocation7], 4
          %s236 = int_to_ptr.vmem [resolvable:$true] %s235
          %241 = dma.hbm_to_vmem [thread:$0]  %s3, 2048, %s236, [#allocation6], 64, 64, 4
        $region24: #{tpu_custom_call.1} parent=11 // pred_fallthru
          _
        // Predicated region
        $region25: #{tpu_custom_call.1} parent=11 // pred_check
          %p242 = pneg %p130
        $region26: #{tpu_custom_call.1} parent=11 // pred_check_branch
          %244 = sbr.rel (%p242) target = $region28
        $region27: #{tpu_custom_call.1} parent=11 // pred_region
          _
        $region28: #{tpu_custom_call.1} parent=11 // pred_fallthru
          _
        // Predicated region
        $region29: #{tpu_custom_call.1} parent=11 // pred_check
          %p245 = pneg %p151
        $region30: #{tpu_custom_call.1} parent=11 // pred_check_branch
          %247 = sbr.rel (%p245) target = $region32
        $region31: #{tpu_custom_call.1} parent=11 // pred_region
          _
        $region32: #{tpu_custom_call.1} parent=11 // pred_fallthru
          _
        // Predicated region
        $region33: #{tpu_custom_call.1} parent=11 // pred_check
          %p248 = pneg %p172
        $region34: #{tpu_custom_call.1} parent=11 // pred_check_branch
          %250 = sbr.rel (%p248) target = $region36
        $region35: #{tpu_custom_call.1} parent=11 // pred_region
          _
        $region36: #{tpu_custom_call.1} parent=11 // pred_fallthru
          _
      $region12: #{tpu_custom_call.1} parent=5 // pred_fallthru
        _
      %p251 = scmp.lt.s32.totalorder %s20, 2
      // Predicated region
      $region37: #{tpu_custom_call.1} parent=5 // pred_check
        %p252 = pneg %p251
      $region38: #{tpu_custom_call.1} parent=5 // pred_check_branch
        %254 = sbr.rel (%p252) target = $region40
      $region39: #{tpu_custom_call.1} parent=5 // pred_region
        // Predicated region
        $region41: #{tpu_custom_call.1} parent=39 // pred_check
          %p255 = pneg %p40
        $region42: #{tpu_custom_call.1} parent=39 // pred_check_branch
          %257 = sbr.rel (%p255) target = $region44
        $region43: #{tpu_custom_call.1} parent=39 // pred_region
          %s258 = sand.u32 %s30, 1
          %s259 = scalar_lea.sflag [#allocation3], %s258
          %s260 = sand.u32 %s30, 1
          %s261 = smul.addr %s260, 8
          %s262 = scalar_lea.vmem [#allocation2], %s261
          %s264 = ssub.s32 128, 128
          %265 = vsyncadd %s259, %s264
          %s266 = smul.addr %s20, 128
          %s267 = scalar_lea.hbm %s0, %s266
          %s269 = sshll.u32 %s262, 4
          %s270 = int_to_ptr.vmem [resolvable:$true] %s269
          %272 = dma.hbm_to_vmem [thread:$0]  %s267, 128, %s270, %s259
        $region44: #{tpu_custom_call.1} parent=39 // pred_fallthru
          _
      $region40: #{tpu_custom_call.1} parent=5 // pred_fallthru
        _
      %p273 = scmp.le.s32.totalorder 1, %s20
      %p274 = scmp.lt.s32.totalorder %s20, 3
      %p275 = pnand %p273, %p274
      %p276 = pneg %p275
      // Predicated region
      $region45: #{tpu_custom_call.1} parent=5 // pred_check
        _
      $region46: #{tpu_custom_call.1} parent=5 // pred_check_branch
        %278 = sbr.rel (%p275) target = $region48
      $region47: #{tpu_custom_call.1} parent=5 // pred_region
        %s279 = ssub.s32 %s20, 1
        %s280 = sand.u32 %s33, 1
        %s281 = scalar_lea.sflag [#allocation3], %s280
        %s282 = sand.u32 %s33, 1
        %s283 = smul.addr %s282, 8
        %s284 = scalar_lea.vmem [#allocation2], %s283
        // Predicated region
        $region49: #{tpu_custom_call.1} parent=47 // pred_check
          %p285 = pneg %p46
        $region50: #{tpu_custom_call.1} parent=47 // pred_check_branch
          %287 = sbr.rel (%p285) target = $region52
        $region51: #{tpu_custom_call.1} parent=47 // pred_region
          %288 = dma.done %s281, 128
        $region52: #{tpu_custom_call.1} parent=47 // pred_fallthru
          _
        // Predicated region
        $region53: #{tpu_custom_call.1} parent=47 // pred_check
          %p289 = pneg %p67
        $region54: #{tpu_custom_call.1} parent=47 // pred_check_branch
          %291 = sbr.rel (%p289) target = $region56
        $region55: #{tpu_custom_call.1} parent=47 // pred_region
          %292 = dma.done [#allocation6], 2048
        $region56: #{tpu_custom_call.1} parent=47 // pred_fallthru
          _
        // Predicated region
        $region57: #{tpu_custom_call.1} parent=47 // pred_check
          %p293 = pneg %p109
        $region58: #{tpu_custom_call.1} parent=47 // pred_check_branch
          %295 = sbr.rel (%p293) target = $region60
        $region59: #{tpu_custom_call.1} parent=47 // pred_region
          %296 = dma.done [#allocation6], 2048
        $region60: #{tpu_custom_call.1} parent=47 // pred_fallthru
          _
        %s297 = sand.u32 %s33, 1
        %s298 = scalar_lea.sflag [#allocation3], %s297
        %s299 = sand.u32 %s33, 1
        %s300 = smul.addr %s299, 8
        %s301 = scalar_lea.vmem [#allocation2], %s300
        %p302 = pneg %p46
        %p303 = pneg %p43
        %p304 = pneg %p67
        %p305 = pneg %p64
        %p306 = pneg %p88
        %p307 = pneg %p85
        %p308 = pneg %p109
        %p309 = pneg %p106
        %p310 = pneg %p130
        %p311 = pneg %p127
        %p312 = pneg %p151
        %p313 = pneg %p148
        %p314 = pneg %p172
        %p315 = pneg %p169
        %p316 = pneg %p198
        %p317 = pneg %p195
        %s318 = sand.u32 %s185, 1
        %s319 = scalar_lea.sflag [#allocation4], %s318
        %s320 = sand.u32 %s185, 1
        %s321 = smul.addr %s320, 8
        %s322 = scalar_lea.vmem [#allocation8], %s321
        %v324 = vld [vmem:[%s284] sm:$0xff]
        %v325 = vpack.c.bf16 %v324, %v324
        %v326 = vld [vmem:[#allocation5] sm:$0xff]
        %v327 = vld [vmem:[#allocation5 + $0x8] sm:$0xff]
        %v328 = vld [vmem:[#allocation5 + $0x10] sm:$0xff]
        %v329 = vld [vmem:[#allocation5 + $0x18] sm:$0xff]
        %v330 = vld [vmem:[#allocation5 + $0x20] sm:$0xff]
        %v331 = vld [vmem:[#allocation5 + $0x28] sm:$0xff]
        %v332 = vld [vmem:[#allocation5 + $0x30] sm:$0xff]
        %v333 = vld [vmem:[#allocation5 + $0x38] sm:$0xff]
        %v334 = vld [vmem:[#allocation5 + $0x40] sm:$0xff]
        %v335 = vld [vmem:[#allocation5 + $0x48] sm:$0xff]
        %v336 = vld [vmem:[#allocation5 + $0x50] sm:$0xff]
        %v337 = vld [vmem:[#allocation5 + $0x58] sm:$0xff]
        %v338 = vld [vmem:[#allocation5 + $0x60] sm:$0xff]
        %v339 = vld [vmem:[#allocation5 + $0x68] sm:$0xff]
        %v340 = vld [vmem:[#allocation5 + $0x70] sm:$0xff]
        %v341 = vld [vmem:[#allocation5 + $0x78] sm:$0xff]
        %v342 = vld [vmem:[%s2] sm:$0x3]
        %v344 = vlaneseq
        %v345 = vshrl.u32 %v344, 7
        %v346 = vsub.s32 0, %v345
        %v347 = vrot.slane %v342, %v346
        %v348 = vlaneseq
        %v349 = vshrl.u32 %v348, 7
        %v350 = vsub.s32 1, %v349
        %v351 = vrot.slane %v342, %v350
        %v370 = vunpack.c.l.b16 %v326
        %v371 = vunpack.c.h.b16 %v326
        %v372 = vunpack.c.l.b16 %v327
        %v373 = vunpack.c.h.b16 %v327
        %v374 = vunpack.c.l.b16 %v328
        %v375 = vunpack.c.h.b16 %v328
        %v376 = vunpack.c.l.b16 %v329
        %v377 = vunpack.c.h.b16 %v329
        %v378 = vunpack.c.l.b16 %v330
        %v379 = vunpack.c.h.b16 %v330
        %v380 = vunpack.c.l.b16 %v331
        %v381 = vunpack.c.h.b16 %v331
        %v382 = vunpack.c.l.b16 %v332
        %v383 = vunpack.c.h.b16 %v332
        %v384 = vunpack.c.l.b16 %v333
        %v385 = vunpack.c.h.b16 %v333
        %v386 = vunpack.c.l.b16 %v334
        %v387 = vunpack.c.h.b16 %v334
        %v388 = vunpack.c.l.b16 %v335
        %v389 = vunpack.c.h.b16 %v335
        %v390 = vunpack.c.l.b16 %v336
        %v391 = vunpack.c.h.b16 %v336
        %v392 = vunpack.c.l.b16 %v337
        %v393 = vunpack.c.h.b16 %v337
        %v394 = vunpack.c.l.b16 %v338
        %v395 = vunpack.c.h.b16 %v338
        %v396 = vunpack.c.l.b16 %v339
        %v397 = vunpack.c.h.b16 %v339
        %v398 = vunpack.c.l.b16 %v340
        %v399 = vunpack.c.h.b16 %v340
        %v400 = vunpack.c.l.b16 %v341
        %v401 = vunpack.c.h.b16 %v341
        %v402 = vpack.c.b16 %v372, %v370
        %v403 = vpack.c.b16 %v373, %v371
        %v404 = vpack.c.b16 %v376, %v374
        %v405 = vpack.c.b16 %v377, %v375
        %v406 = vpack.c.b16 %v380, %v378
        %v407 = vpack.c.b16 %v381, %v379
        %v408 = vpack.c.b16 %v384, %v382
        %v409 = vpack.c.b16 %v385, %v383
        %v410 = vpack.c.b16 %v388, %v386
        %v411 = vpack.c.b16 %v389, %v387
        %v412 = vpack.c.b16 %v392, %v390
        %v413 = vpack.c.b16 %v393, %v391
        %v414 = vpack.c.b16 %v396, %v394
        %v415 = vpack.c.b16 %v397, %v395
        %v416 = vpack.c.b16 %v400, %v398
        %v417 = vpack.c.b16 %v401, %v399
        %434 = vmatprep.subr.bf16.mxu0 %v403
        %435 = vmatpush1.bf16.msra.mxu0 %v402
        %436 = vmatprep.subr.bf16.mxu0 %v405
        %437 = vmatpush1.bf16.msra.mxu0 %v404
        %438 = vmatprep.subr.bf16.mxu0 %v407
        %439 = vmatpush1.bf16.msra.mxu0 %v406
        %440 = vmatprep.subr.bf16.mxu0 %v409
        %441 = vmatpush1.bf16.msra.mxu0 %v408
        %442 = vmatprep.subr.bf16.mxu0 %v411
        %443 = vmatpush1.bf16.msra.mxu0 %v410
        %444 = vmatprep.subr.bf16.mxu0 %v413
        %445 = vmatpush1.bf16.msra.mxu0 %v412
        %446 = vmatprep.subr.bf16.mxu0 %v415
        %447 = vmatpush1.bf16.msra.mxu0 %v414
        %448 = vmatprep.subr.bf16.mxu0 %v417
        %449 = vmatpush1.bf16.msra.mxu0 %v416
        %450 = vmatprep.subr.bf16.mxu0 0
        %451 = vmatpush1.bf16.msra.mxu0 0
        %452 = vmatprep.subr.bf16.mxu0 0
        %453 = vmatpush1.bf16.msra.mxu0 0
        %454 = vmatprep.subr.bf16.mxu0 0
        %455 = vmatpush1.bf16.msra.mxu0 0
        %456 = vmatprep.subr.bf16.mxu0 0
        %457 = vmatpush1.bf16.msra.mxu0 0
        %458 = vmatprep.subr.bf16.mxu0 0
        %459 = vmatpush1.bf16.msra.mxu0 0
        %460 = vmatprep.subr.bf16.mxu0 0
        %461 = vmatpush1.bf16.msra.mxu0 0
        %462 = vmatprep.subr.bf16.mxu0 0
        %463 = vmatpush1.bf16.msra.mxu0 0
        %464 = vmatprep.subr.bf16.mxu0 0
        %465 = vmatpush1.bf16.msra.mxu0 0
        %466 = vmatprep.mubr.bf16.mxu0 0
        %467 = vmatmul.mubr.bf16.gmra.mrb[0].mxu0 %v325
        %v468 = vpop.f32.mrb[0].mxu0
        %v469 = vadd.f32 %v347, %v468
        %v470 = vpop.f32.mrb[0].mxu0
        %v471 = vadd.f32 %v351, %v470
        %v472 = vpop.f32.mrb[0].mxu0
        %v473 = vpop.f32.mrb[0].mxu0
        %474 = vdwg.mxu0
        %v475 = vmul.f32 %v469, 0.5
        %v476 = vmul.f32 %v471, 0.5
        %v477 = vmul.f32 %v469, 0.70710677
        %v478 = vmul.f32 %v471, 0.70710677
        %v479 = verf.f32.pop %v477
        %v480 = verf.f32.pop %v478
        %v481 = vadd.f32 %v479, 1.0
        %v482 = vadd.f32 %v480, 1.0
        %v483 = vmul.f32 %v475, %v481
        %v484 = vmul.f32 %v476, %v482
        %v485 = vpack.c.bf16 %v483, %v483
        %v486 = vpack.c.bf16 %v484, %v484
        %v487 = vld [vmem:[#allocation7] sm:$0xf]
        %v488 = vld [vmem:[#allocation7 + $0x4] sm:$0xf]
        %v489 = vld [vmem:[#allocation7 + $0x8] sm:$0xf]
        %v490 = vld [vmem:[#allocation7 + $0xc] sm:$0xf]
        %v491 = vld [vmem:[#allocation7 + $0x10] sm:$0xf]
        %v492 = vld [vmem:[#allocation7 + $0x14] sm:$0xf]
        %v493 = vld [vmem:[#allocation7 + $0x18] sm:$0xf]
        %v494 = vld [vmem:[#allocation7 + $0x1c] sm:$0xf]
        %v495 = vld [vmem:[#allocation7 + $0x20] sm:$0xf]
        %v496 = vld [vmem:[#allocation7 + $0x24] sm:$0xf]
        %v497 = vld [vmem:[#allocation7 + $0x28] sm:$0xf]
        %v498 = vld [vmem:[#allocation7 + $0x2c] sm:$0xf]
        %v499 = vld [vmem:[#allocation7 + $0x30] sm:$0xf]
        %v500 = vld [vmem:[#allocation7 + $0x34] sm:$0xf]
        %v501 = vld [vmem:[#allocation7 + $0x38] sm:$0xf]
        %v502 = vld [vmem:[#allocation7 + $0x3c] sm:$0xf]
        %v503 = vld [vmem:[#allocation7 + $0x40] sm:$0xf]
        %v504 = vld [vmem:[#allocation7 + $0x44] sm:$0xf]
        %v505 = vld [vmem:[#allocation7 + $0x48] sm:$0xf]
        %v506 = vld [vmem:[#allocation7 + $0x4c] sm:$0xf]
        %v507 = vld [vmem:[#allocation7 + $0x50] sm:$0xf]
        %v508 = vld [vmem:[#allocation7 + $0x54] sm:$0xf]
        %v509 = vld [vmem:[#allocation7 + $0x58] sm:$0xf]
        %v510 = vld [vmem:[#allocation7 + $0x5c] sm:$0xf]
        %v511 = vld [vmem:[#allocation7 + $0x60] sm:$0xf]
        %v512 = vld [vmem:[#allocation7 + $0x64] sm:$0xf]
        %v513 = vld [vmem:[#allocation7 + $0x68] sm:$0xf]
        %v514 = vld [vmem:[#allocation7 + $0x6c] sm:$0xf]
        %v515 = vld [vmem:[#allocation7 + $0x70] sm:$0xf]
        %v516 = vld [vmem:[#allocation7 + $0x74] sm:$0xf]
        %v517 = vld [vmem:[#allocation7 + $0x78] sm:$0xf]
        %v518 = vld [vmem:[#allocation7 + $0x7c] sm:$0xf]
        %v519 = vld [vmem:[%s4] sm:$0x1]
        %v521 = vlaneseq
        %v522 = vshrl.u32 %v521, 7
        %v523 = vsub.s32 0, %v522
        %v524 = vrot.slane %v519, %v523
        %v558 = vunpack.c.l.b16 %v487
        %v559 = vunpack.c.l.b16 %v488
        %v560 = vunpack.c.l.b16 %v489
        %v561 = vunpack.c.l.b16 %v490
        %v562 = vunpack.c.l.b16 %v491
        %v563 = vunpack.c.l.b16 %v492
        %v564 = vunpack.c.l.b16 %v493
        %v565 = vunpack.c.l.b16 %v494
        %v566 = vunpack.c.l.b16 %v495
        %v567 = vunpack.c.l.b16 %v496
        %v568 = vunpack.c.l.b16 %v497
        %v569 = vunpack.c.l.b16 %v498
        %v570 = vunpack.c.l.b16 %v499
        %v571 = vunpack.c.l.b16 %v500
        %v572 = vunpack.c.l.b16 %v501
        %v573 = vunpack.c.l.b16 %v502
        %v574 = vunpack.c.l.b16 %v503
        %v575 = vunpack.c.l.b16 %v504
        %v576 = vunpack.c.l.b16 %v505
        %v577 = vunpack.c.l.b16 %v506
        %v578 = vunpack.c.l.b16 %v507
        %v579 = vunpack.c.l.b16 %v508
        %v580 = vunpack.c.l.b16 %v509
        %v581 = vunpack.c.l.b16 %v510
        %v582 = vunpack.c.l.b16 %v511
        %v583 = vunpack.c.l.b16 %v512
        %v584 = vunpack.c.l.b16 %v513
        %v585 = vunpack.c.l.b16 %v514
        %v586 = vunpack.c.l.b16 %v515
        %v587 = vunpack.c.l.b16 %v516
        %v588 = vunpack.c.l.b16 %v517
        %v589 = vunpack.c.l.b16 %v518
        %v590 = vpack.c.b16 %v559, %v558
        %v591 = vpack.c.b16 %v561, %v560
        %v592 = vpack.c.b16 %v563, %v562
        %v593 = vpack.c.b16 %v565, %v564
        %v594 = vpack.c.b16 %v567, %v566
        %v595 = vpack.c.b16 %v569, %v568
        %v596 = vpack.c.b16 %v571, %v570
        %v597 = vpack.c.b16 %v573, %v572
        %v598 = vpack.c.b16 %v575, %v574
        %v599 = vpack.c.b16 %v577, %v576
        %v600 = vpack.c.b16 %v579, %v578
        %v601 = vpack.c.b16 %v581, %v580
        %v602 = vpack.c.b16 %v583, %v582
        %v603 = vpack.c.b16 %v585, %v584
        %v604 = vpack.c.b16 %v587, %v586
        %v605 = vpack.c.b16 %v589, %v588
        %622 = vmatprep.subr.bf16.mxu0 0
        %623 = vmatpush1.bf16.msra.mxu0 %v590
        %624 = vmatprep.subr.bf16.mxu0 0
        %625 = vmatpush1.bf16.msra.mxu0 %v591
        %626 = vmatprep.subr.bf16.mxu0 0
        %627 = vmatpush1.bf16.msra.mxu0 %v592
        %628 = vmatprep.subr.bf16.mxu0 0
        %629 = vmatpush1.bf16.msra.mxu0 %v593
        %630 = vmatprep.subr.bf16.mxu0 0
        %631 = vmatpush1.bf16.msra.mxu0 %v594
        %632 = vmatprep.subr.bf16.mxu0 0
        %633 = vmatpush1.bf16.msra.mxu0 %v595
        %634 = vmatprep.subr.bf16.mxu0 0
        %635 = vmatpush1.bf16.msra.mxu0 %v596
        %636 = vmatprep.subr.bf16.mxu0 0
        %637 = vmatpush1.bf16.msra.mxu0 %v597
        %638 = vmatprep.subr.bf16.mxu0 0
        %639 = vmatpush1.bf16.msra.mxu0 %v598
        %640 = vmatprep.subr.bf16.mxu0 0
        %641 = vmatpush1.bf16.msra.mxu0 %v599
        %642 = vmatprep.subr.bf16.mxu0 0
        %643 = vmatpush1.bf16.msra.mxu0 %v600
        %644 = vmatprep.subr.bf16.mxu0 0
        %645 = vmatpush1.bf16.msra.mxu0 %v601
        %646 = vmatprep.subr.bf16.mxu0 0
        %647 = vmatpush1.bf16.msra.mxu0 %v602
        %648 = vmatprep.subr.bf16.mxu0 0
        %649 = vmatpush1.bf16.msra.mxu0 %v603
        %650 = vmatprep.subr.bf16.mxu0 0
        %651 = vmatpush1.bf16.msra.mxu0 %v604
        %652 = vmatprep.subr.bf16.mxu0 0
        %653 = vmatpush1.bf16.msra.mxu0 %v605
        %654 = vmatprep.mubr.bf16.mxu0 %v486
        %655 = vmatmul.mubr.bf16.gmra.mrb[0].mxu0 %v485
        %v656 = vpop.f32.mrb[0].mxu0
        %v657 = vadd.f32 %v524, %v656
        %v658 = vpop.f32.mrb[0].mxu0
        %v659 = vpop.f32.mrb[0].mxu0
        %v660 = vpop.f32.mrb[0].mxu0
        %661 = vdwg.mxu0
        %v662 = vadd.f32 %v324, %v657
        %v663 = vld [vmem:[%s5] sm:$0x1]
        %v664 = vld [vmem:[%s6] sm:$0x1]
        %665 = vadd.xlane.f32.xlu0 %v662
        %v666 = vpop.xlane.xlu0 %665
        %v667 = vrcp.pop 128.0
        %v668 = vmul.f32 %v666, %v667
        %v669 = vmul.f32 %v662, %v662
        %670 = vadd.xlane.f32.xlu0 %v669
        %v671 = vpop.xlane.xlu0 %670
        %v672 = vmul.f32 %v671, %v667
        %v673 = vmul.f32 %v668, %v668
        %v674 = vsub.f32 %v672, %v673
        %v675 = vsub.f32 %v662, %v668
        %v676 = vadd.f32 %v674, 1e-05
        %v677 = vrsqrt.pop %v676
        %v678 = vmul.f32 %v675, %v677
        %v680 = vlaneseq
        %v681 = vshrl.u32 %v680, 7
        %v682 = vsub.s32 0, %v681
        %v683 = vrot.slane %v663, %v682
        %v685 = vmul.f32 %v678, %v683
        %v687 = vlaneseq
        %v688 = vshrl.u32 %v687, 7
        %v689 = vsub.s32 0, %v688
        %v690 = vrot.slane %v664, %v689
        %v692 = vadd.f32 %v685, %v690
        %693 = vst [vmem:[%s322] sm:$0xff] %v692
        %s694 = sand.u32 %s185, 1
        %s695 = scalar_lea.sflag [#allocation4], %s694
        %s696 = sand.u32 %s185, 1
        %s697 = smul.addr %s696, 8
        %s698 = scalar_lea.vmem [#allocation8], %s697
        // Predicated region
        $region61: #{tpu_custom_call.1} parent=47 // pred_check
          %p699 = pneg %p195
        $region62: #{tpu_custom_call.1} parent=47 // pred_check_branch
          %701 = sbr.rel (%p699) target = $region64
        $region63: #{tpu_custom_call.1} parent=47 // pred_region
          %s703 = ssub.s32 128, 128
          %704 = vsyncadd %s695, %s703
          %s705 = smul.addr %s25, 128
          %s706 = scalar_lea.hbm %s7, %s705
          %s708 = sshll.u32 %s698, 4
          %s709 = int_to_ptr.vmem [resolvable:$true] %s708
          %711 = dma.vmem_to_hbm [thread:$0]  %s709, 128, %s706, %s695
        $region64: #{tpu_custom_call.1} parent=47 // pred_fallthru
          _
      $region48: #{tpu_custom_call.1} parent=5 // pred_fallthru
        _
      %p712 = scmp.le.s32.totalorder 2, %s20
      // Predicated region
      $region65: #{tpu_custom_call.1} parent=5 // pred_check
        %p713 = pneg %p712
      $region66: #{tpu_custom_call.1} parent=5 // pred_check_branch
        %715 = sbr.rel (%p713) target = $region68
      $region67: #{tpu_custom_call.1} parent=5 // pred_region
        %s716 = ssub.s32 %s20, 2
        // Predicated region
        $region69: #{tpu_custom_call.1} parent=67 // pred_check
          %p717 = pneg %p201
        $region70: #{tpu_custom_call.1} parent=67 // pred_check_branch
          %719 = sbr.rel (%p717) target = $region72
        $region71: #{tpu_custom_call.1} parent=67 // pred_region
          %s720 = sand.u32 %s186, 1
          %s721 = scalar_lea.sflag [#allocation4], %s720
          %s722 = sand.u32 %s186, 1
          %s723 = smul.addr %s722, 8
          %s724 = scalar_lea.vmem [#allocation8], %s723
          %725 = dma.done %s721, 128
        $region72: #{tpu_custom_call.1} parent=67 // pred_fallthru
          _
      $region68: #{tpu_custom_call.1} parent=5 // pred_fallthru
        _
    $region6: #{tpu_custom_call.1} parent=1 // loop_footer
      %s24 = sadd.s32 1, %s20
    $region7: #{tpu_custom_call.1} parent=1 // loop_footer_branch
      %19 = sbr.rel target = $region3
    $region8: #{tpu_custom_call.1} parent=1 // loop_exit
      _
    %726 = vsyncpa [#allocation3], 1
    %s727 = scalar_lea.sflag [#allocation3], 1
    %728 = vsyncpa %s727, 1
    %729 = vsyncpa [#allocation6], 1
    %730 = vsyncpa [#allocation4], 1
    %s731 = scalar_lea.sflag [#allocation4], 1
    %732 = vsyncpa %s731, 1

// kernel: tpu_custom_call.1
$region0: #{tpu_custom_call.1}
  #allocation0 [shape = 'u32[]', space=smem, size = 0x4, offset = 0x4, fixed_abs, tag = 'smem constant byte address 0x4 - core index']
  #allocation1 [shape = 'u32[144,128]{1,0:T(1,128)}', space=vmem, size = 0x12000, scoped, tag = 'internal scratch']
  %s0 = inlined_call_operand.hbm [shape: f32[16,128], index: 0, kind: input, shape index: {}]
  %s1 = inlined_call_operand.hbm [shape: bf16[128,256], index: 1, kind: input, shape index: {}]
  %s2 = inlined_call_operand.vmem [shape: f32[1,256], index: 2, kind: input, shape index: {}]
  %s3 = inlined_call_operand.hbm [shape: bf16[256,128], index: 3, kind: input, shape index: {}]
  %s4 = inlined_call_operand.vmem [shape: f32[1,128], index: 4, kind: input, shape index: {}]
  %s5 = inlined_call_operand.vmem [shape: f32[1,128], index: 5, kind: input, shape index: {}]
  %s6 = inlined_call_operand.vmem [shape: f32[1,128], index: 6, kind: input, shape index: {}]
  %s7 = inlined_call_operand.hbm [shape: f32[16,128], index: 7, kind: output, shape index: {}]
  %s8 = sld [smem:[#allocation0]]
  $region73: #{tpu_custom_call.1} parent=0
    _
  %s10 = ssub.s32 1, %s8
  %s11 = scalar_select 0, %s10, %s8
  $region1: #{tpu_custom_call.1} parent=0
    #allocation2 [shape = 'u8[8192]{0}', space=vmem, size = 0x2000, scoped, tag = 'input window, operand 0']
    #allocation3 [shape = 's32[2]{0}', space=sflag, size = 0x8, scoped, tag = 'scoped memory for tpu_custom_call.1']
    #allocation4 [shape = 's32[2]{0}', space=sflag, size = 0x8, scoped, tag = 'scoped memory for tpu_custom_call.1']
    #allocation5 [shape = 'u8[65536]{0}', space=vmem, size = 0x10000, scoped, tag = 'input window, operand 1, single buffered']
    #allocation6 [shape = 's32[1]{0}', space=sflag, size = 0x4, scoped, tag = 'scoped memory for tpu_custom_call.1']
    #allocation7 [shape = 'u8[65536]{0}', space=vmem, size = 0x10000, scoped, tag = 'input window, operand 3, single buffered']
    #allocation8 [shape = 'u8[8192]{0}', space=vmem, size = 0x2000, scoped, tag = 'output window, operand 0']
    %12 = vsyncpa [#allocation3], 0
    %s13 = scalar_lea.sflag [#allocation3], 1
    %14 = vsyncpa %s13, 0
    %15 = vsyncpa [#allocation6], 0
    %16 = vsyncpa [#allocation4], 0
    %s17 = scalar_lea.sflag [#allocation4], 1
    %18 = vsyncpa %s17, 0
    loop: start=0, step=1, limit=4
    $region2: #{tpu_custom_call.1} parent=1 // loop_pre_header
      _
    $region3: #{tpu_custom_call.1} parent=1 // loop_header
      %s20 = sphi 0, %s24
      %p21 = scmp.ge.s32.totalorder %s20, 4
      %s30 = sphi 0, %s32
      %s33 = sphi 0, %s30
      %s34 = sphi 0, %s33
      %s50 = sphi 0, %s34
      %s54 = sphi 0, %s54
      %s56 = sphi 0, %s54
      %s57 = sphi 0, %s56
      %s71 = sphi 0, %s57
      %s75 = sphi 0, %s75
      %s77 = sphi 0, %s75
      %s78 = sphi 0, %s77
      %s92 = sphi 0, %s78
      %s96 = sphi 0, %s96
      %s98 = sphi 0, %s96
      %s99 = sphi 0, %s98
      %s113 = sphi 0, %s99
      %s117 = sphi 0, %s117
      %s119 = sphi 0, %s117
      %s120 = sphi 0, %s119
      %s134 = sphi 0, %s120
      %s138 = sphi 0, %s138
      %s140 = sphi 0, %s138
      %s141 = sphi 0, %s140
      %s155 = sphi 0, %s141
      %s159 = sphi 0, %s159
      %s161 = sphi 0, %s159
      %s162 = sphi 0, %s161
      %s176 = sphi 0, %s162
      %s182 = sphi 0, %s184
      %s185 = sphi 0, %s182
      %s186 = sphi 0, %s185
      %s202 = sphi 0, %s186
    $region4: #{tpu_custom_call.1} parent=1 // loop_header_branch
      %23 = sbr.rel (%p21) target = $region8
    $region5: #{tpu_custom_call.1} parent=1 // loop_body
      %s25 = ssub.s32 %s20, 1
      %s26 = ssub.s32 %s20, 2
      %s27 = sadd.s32 %s20, 1
      %s28 = ssub.s32 %s20, %s27
      %p29 = scmp.eq.s32.totalorder %s28, 0
      %s31 = sadd.s32 %s30, 1
      %s32 = scalar_select %p29, %s30, %s31
      %p35 = pneg %p29
      %p36 = scmp.eq.s32.totalorder %s20, 1
      %p37 = por %p35, %p36
      %p38 = scmp.ne.s32.totalorder %s30, %s33
      %p39 = scmp.eq.s32.totalorder %s20, 0
      %p40 = por %p38, %p39
      %p41 = scmp.ne.s32.totalorder %s30, %s33
      %p42 = scmp.eq.s32.totalorder %s25, 1
      %p43 = por %p41, %p42
      %p44 = scmp.ne.s32.totalorder %s33, %s34
      %p45 = scmp.eq.s32.totalorder %s25, 0
      %p46 = por %p44, %p45
      %p47 = scmp.ne.s32.totalorder %s33, %s34
      %p48 = scmp.eq.s32.totalorder %s26, 1
      %p49 = por %p47, %p48
      %p51 = scmp.ne.s32.totalorder %s34, %s50
      %p52 = scmp.eq.s32.totalorder %s26, 0
      %p53 = por %p51, %p52
      %s55 = sadd.s32 %s54, 1
      %p58 = scmp.eq.s32.totalorder %s20, 1
      %p59 = scmp.ne.s32.totalorder %s54, %s56
      %p60 = scmp.eq.s32.totalorder %s20, 0
      %p61 = por %p59, %p60
      %p62 = scmp.ne.s32.totalorder %s54, %s56
      %p63 = scmp.eq.s32.totalorder %s25, 1
      %p64 = por %p62, %p63
      %p65 = scmp.ne.s32.totalorder %s56, %s57
      %p66 = scmp.eq.s32.totalorder %s25, 0
      %p67 = por %p65, %p66
      %p68 = scmp.ne.s32.totalorder %s56, %s57
      %p69 = scmp.eq.s32.totalorder %s26, 1
      %p70 = por %p68, %p69
      %p72 = scmp.ne.s32.totalorder %s57, %s71
      %p73 = scmp.eq.s32.totalorder %s26, 0
      %p74 = por %p72, %p73
      %s76 = sadd.s32 %s75, 1
      %p79 = scmp.eq.s32.totalorder %s20, 1
      %p80 = scmp.ne.s32.totalorder %s75, %s77
      %p81 = scmp.eq.s32.totalorder %s20, 0
      %p82 = por %p80, %p81
      %p83 = scmp.ne.s32.totalorder %s75, %s77
      %p84 = scmp.eq.s32.totalorder %s25, 1
      %p85 = por %p83, %p84
      %p86 = scmp.ne.s32.totalorder %s77, %s78
      %p87 = scmp.eq.s32.totalorder %s25, 0
      %p88 = por %p86, %p87
      %p89 = scmp.ne.s32.totalorder %s77, %s78
      %p90 = scmp.eq.s32.totalorder %s26, 1
      %p91 = por %p89, %p90
      %p93 = scmp.ne.s32.totalorder %s78, %s92
      %p94 = scmp.eq.s32.totalorder %s26, 0
      %p95 = por %p93, %p94
      %s97 = sadd.s32 %s96, 1
      %p100 = scmp.eq.s32.totalorder %s20, 1
      %p101 = scmp.ne.s32.totalorder %s96, %s98
      %p102 = scmp.eq.s32.totalorder %s20, 0
      %p103 = por %p101, %p102
      %p104 = scmp.ne.s32.totalorder %s96, %s98
      %p105 = scmp.eq.s32.totalorder %s25, 1
      %p106 = por %p104, %p105
      %p107 = scmp.ne.s32.totalorder %s98, %s99
      %p108 = scmp.eq.s32.totalorder %s25, 0
      %p109 = por %p107, %p108
      %p110 = scmp.ne.s32.totalorder %s98, %s99
      %p111 = scmp.eq.s32.totalorder %s26, 1
      %p112 = por %p110, %p111
      %p114 = scmp.ne.s32.totalorder %s99, %s113
      %p115 = scmp.eq.s32.totalorder %s26, 0
      %p116 = por %p114, %p115
      %s118 = sadd.s32 %s117, 1
      %p121 = scmp.eq.s32.totalorder %s20, 1
      %p122 = scmp.ne.s32.totalorder %s117, %s119
      %p123 = scmp.eq.s32.totalorder %s20, 0
      %p124 = por %p122, %p123
      %p125 = scmp.ne.s32.totalorder %s117, %s119
      %p126 = scmp.eq.s32.totalorder %s25, 1
      %p127 = por %p125, %p126
      %p128 = scmp.ne.s32.totalorder %s119, %s120
      %p129 = scmp.eq.s32.totalorder %s25, 0
      %p130 = por %p128, %p129
      %p131 = scmp.ne.s32.totalorder %s119, %s120
      %p132 = scmp.eq.s32.totalorder %s26, 1
      %p133 = por %p131, %p132
      %p135 = scmp.ne.s32.totalorder %s120, %s134
      %p136 = scmp.eq.s32.totalorder %s26, 0
      %p137 = por %p135, %p136
      %s139 = sadd.s32 %s138, 1
      %p142 = scmp.eq.s32.totalorder %s20, 1
      %p143 = scmp.ne.s32.totalorder %s138, %s140
      %p144 = scmp.eq.s32.totalorder %s20, 0
      %p145 = por %p143, %p144
      %p146 = scmp.ne.s32.totalorder %s138, %s140
      %p147 = scmp.eq.s32.totalorder %s25, 1
      %p148 = por %p146, %p147
      %p149 = scmp.ne.s32.totalorder %s140, %s141
      %p150 = scmp.eq.s32.totalorder %s25, 0
      %p151 = por %p149, %p150
      %p152 = scmp.ne.s32.totalorder %s140, %s141
      %p153 = scmp.eq.s32.totalorder %s26, 1
      %p154 = por %p152, %p153
      %p156 = scmp.ne.s32.totalorder %s141, %s155
      %p157 = scmp.eq.s32.totalorder %s26, 0
      %p158 = por %p156, %p157
      %s160 = sadd.s32 %s159, 1
      %p163 = scmp.eq.s32.totalorder %s20, 1
      %p164 = scmp.ne.s32.totalorder %s159, %s161
      %p165 = scmp.eq.s32.totalorder %s20, 0
      %p166 = por %p164, %p165
      %p167 = scmp.ne.s32.totalorder %s159, %s161
      %p168 = scmp.eq.s32.totalorder %s25, 1
      %p169 = por %p167, %p168
      %p170 = scmp.ne.s32.totalorder %s161, %s162
      %p171 = scmp.eq.s32.totalorder %s25, 0
      %p172 = por %p170, %p171
      %p173 = scmp.ne.s32.totalorder %s161, %s162
      %p174 = scmp.eq.s32.totalorder %s26, 1
      %p175 = por %p173, %p174
      %p177 = scmp.ne.s32.totalorder %s162, %s176
      %p178 = scmp.eq.s32.totalorder %s26, 0
      %p179 = por %p177, %p178
      %s180 = ssub.s32 %s20, %s27
      %p181 = scmp.eq.s32.totalorder %s180, 0
      %s183 = sadd.s32 %s182, 1
      %s184 = scalar_select %p181, %s182, %s183
      %p187 = pneg %p181
      %p188 = scmp.eq.s32.totalorder %s20, 1
      %p189 = por %p187, %p188
      %p190 = scmp.ne.s32.totalorder %s182, %s185
      %p191 = scmp.eq.s32.totalorder %s20, 0
      %p192 = por %p190, %p191
      %p193 = scmp.ne.s32.totalorder %s182, %s185
      %p194 = scmp.eq.s32.totalorder %s25, 1
      %p195 = por %p193, %p194
      %p196 = scmp.ne.s32.totalorder %s185, %s186
      %p197 = scmp.eq.s32.totalorder %s25, 0
      %p198 = por %p196, %p197
      %p199 = scmp.ne.s32.totalorder %s185, %s186
      %p200 = scmp.eq.s32.totalorder %s26, 1
      %p201 = por %p199, %p200
      %p203 = scmp.ne.s32.totalorder %s186, %s202
      %p204 = scmp.eq.s32.totalorder %s26, 0
      %p205 = por %p203, %p204
      %p206 = scmp.le.s32.totalorder 1, %s20
      %p207 = scmp.lt.s32.totalorder %s20, 3
      %p208 = pnand %p206, %p207
      %p209 = pneg %p208
      // Predicated region
      $region9: #{tpu_custom_call.1} parent=5 // pred_check
        _
      $region10: #{tpu_custom_call.1} parent=5 // pred_check_branch
        %211 = sbr.rel (%p208) target = $region12
      $region11: #{tpu_custom_call.1} parent=5 // pred_region
        %s212 = ssub.s32 %s20, 1
        // Predicated region
        $region13: #{tpu_custom_call.1} parent=11 // pred_check
          %p213 = pneg %p67
        $region14: #{tpu_custom_call.1} parent=11 // pred_check_branch
          %215 = sbr.rel (%p213) target = $region16
        $region15: #{tpu_custom_call.1} parent=11 // pred_region
          %s217 = ssub.s32 2048, 2048
          %218 = vsyncadd [#allocation6], %s217
          %s219 = sshll.u32 [#allocation5], 4
          %s220 = int_to_ptr.vmem [resolvable:$true] %s219
          %225 = dma.hbm_to_vmem [thread:$0]  %s1, 2048, %s220, [#allocation6], 128, 128, 8
        $region16: #{tpu_custom_call.1} parent=11 // pred_fallthru
          _
        // Predicated region
        $region17: #{tpu_custom_call.1} parent=11 // pred_check
          %p226 = pneg %p88
        $region18: #{tpu_custom_call.1} parent=11 // pred_check_branch
          %228 = sbr.rel (%p226) target = $region20
        $region19: #{tpu_custom_call.1} parent=11 // pred_region
          _
        $region20: #{tpu_custom_call.1} parent=11 // pred_fallthru
          _
        // Predicated region
        $region21: #{tpu_custom_call.1} parent=11 // pred_check
          %p229 = pneg %p109
        $region22: #{tpu_custom_call.1} parent=11 // pred_check_branch
          %231 = sbr.rel (%p229) target = $region24
        $region23: #{tpu_custom_call.1} parent=11 // pred_region
          %s233 = ssub.s32 2048, 2048
          %234 = vsyncadd [#allocation6], %s233
          %s235 = sshll.u32 [#allocation7], 4
          %s236 = int_to_ptr.vmem [resolvable:$true] %s235
          %241 = dma.hbm_to_vmem [thread:$0]  %s3, 2048, %s236, [#allocation6], 64, 64, 4
        $region24: #{tpu_custom_call.1} parent=11 // pred_fallthru
          _
        // Predicated region
        $region25: #{tpu_custom_call.1} parent=11 // pred_check
          %p242 = pneg %p130
        $region26: #{tpu_custom_call.1} parent=11 // pred_check_branch
          %244 = sbr.rel (%p242) target = $region28
        $region27: #{tpu_custom_call.1} parent=11 // pred_region
          _
        $region28: #{tpu_custom_call.1} parent=11 // pred_fallthru
          _
        // Predicated region
        $region29: #{tpu_custom_call.1} parent=11 // pred_check
          %p245 = pneg %p151
        $region30: #{tpu_custom_call.1} parent=11 // pred_check_branch
          %247 = sbr.rel (%p245) target = $region32
        $region31: #{tpu_custom_call.1} parent=11 // pred_region
          _
        $region32: #{tpu_custom_call.1} parent=11 // pred_fallthru
          _
        // Predicated region
        $region33: #{tpu_custom_call.1} parent=11 // pred_check
          %p248 = pneg %p172
        $region34: #{tpu_custom_call.1} parent=11 // pred_check_branch
          %250 = sbr.rel (%p248) target = $region36
        $region35: #{tpu_custom_call.1} parent=11 // pred_region
          _
        $region36: #{tpu_custom_call.1} parent=11 // pred_fallthru
          _
      $region12: #{tpu_custom_call.1} parent=5 // pred_fallthru
        _
      %p251 = scmp.lt.s32.totalorder %s20, 2
      // Predicated region
      $region37: #{tpu_custom_call.1} parent=5 // pred_check
        %p252 = pneg %p251
      $region38: #{tpu_custom_call.1} parent=5 // pred_check_branch
        %254 = sbr.rel (%p252) target = $region40
      $region39: #{tpu_custom_call.1} parent=5 // pred_region
        // Predicated region
        $region41: #{tpu_custom_call.1} parent=39 // pred_check
          %p255 = pneg %p40
        $region42: #{tpu_custom_call.1} parent=39 // pred_check_branch
          %257 = sbr.rel (%p255) target = $region44
        $region43: #{tpu_custom_call.1} parent=39 // pred_region
          %s258 = sand.u32 %s30, 1
          %s259 = scalar_lea.sflag [#allocation3], %s258
          %s260 = sand.u32 %s30, 1
          %s261 = smul.addr %s260, 8
          %s262 = scalar_lea.vmem [#allocation2], %s261
          %s264 = ssub.s32 128, 128
          %265 = vsyncadd %s259, %s264
          %s266 = smul.addr %s20, 128
          %s267 = scalar_lea.hbm %s0, %s266
          %s269 = sshll.u32 %s262, 4
          %s270 = int_to_ptr.vmem [resolvable:$true] %s269
          %272 = dma.hbm_to_vmem [thread:$0]  %s267, 128, %s270, %s259
        $region44: #{tpu_custom_call.1} parent=39 // pred_fallthru
          _
      $region40: #{tpu_custom_call.1} parent=5 // pred_fallthru
        _
      %p273 = scmp.le.s32.totalorder 1, %s20
      %p274 = scmp.lt.s32.totalorder %s20, 3
      %p275 = pnand %p273, %p274
      %p276 = pneg %p275
      // Predicated region
      $region45: #{tpu_custom_call.1} parent=5 // pred_check
        _
      $region46: #{tpu_custom_call.1} parent=5 // pred_check_branch
        %278 = sbr.rel (%p275) target = $region48
      $region47: #{tpu_custom_call.1} parent=5 // pred_region
        %s279 = ssub.s32 %s20, 1
        %s280 = sand.u32 %s33, 1
        %s281 = scalar_lea.sflag [#allocation3], %s280
        %s282 = sand.u32 %s33, 1
        %s283 = smul.addr %s282, 8
        %s284 = scalar_lea.vmem [#allocation2], %s283
        // Predicated region
        $region49: #{tpu_custom_call.1} parent=47 // pred_check
          %p285 = pneg %p46
        $region50: #{tpu_custom_call.1} parent=47 // pred_check_branch
          %287 = sbr.rel (%p285) target = $region52
        $region51: #{tpu_custom_call.1} parent=47 // pred_region
          %288 = dma.done %s281, 128
        $region52: #{tpu_custom_call.1} parent=47 // pred_fallthru
          _
        // Predicated region
        $region53: #{tpu_custom_call.1} parent=47 // pred_check
          %p289 = pneg %p67
        $region54: #{tpu_custom_call.1} parent=47 // pred_check_branch
          %291 = sbr.rel (%p289) target = $region56
        $region55: #{tpu_custom_call.1} parent=47 // pred_region
          %292 = dma.done [#allocation6], 2048
        $region56: #{tpu_custom_call.1} parent=47 // pred_fallthru
          _
        // Predicated region
        $region57: #{tpu_custom_call.1} parent=47 // pred_check
          %p293 = pneg %p109
        $region58: #{tpu_custom_call.1} parent=47 // pred_check_branch
          %295 = sbr.rel (%p293) target = $region60
        $region59: #{tpu_custom_call.1} parent=47 // pred_region
          %296 = dma.done [#allocation6], 2048
        $region60: #{tpu_custom_call.1} parent=47 // pred_fallthru
          _
        %s297 = sand.u32 %s33, 1
        %s298 = scalar_lea.sflag [#allocation3], %s297
        %s299 = sand.u32 %s33, 1
        %s300 = smul.addr %s299, 8
        %s301 = scalar_lea.vmem [#allocation2], %s300
        %p302 = pneg %p46
        %p303 = pneg %p43
        %p304 = pneg %p67
        %p305 = pneg %p64
        %p306 = pneg %p88
        %p307 = pneg %p85
        %p308 = pneg %p109
        %p309 = pneg %p106
        %p310 = pneg %p130
        %p311 = pneg %p127
        %p312 = pneg %p151
        %p313 = pneg %p148
        %p314 = pneg %p172
        %p315 = pneg %p169
        %p316 = pneg %p198
        %p317 = pneg %p195
        %s318 = sand.u32 %s185, 1
        %s319 = scalar_lea.sflag [#allocation4], %s318
        %s320 = sand.u32 %s185, 1
        %s321 = smul.addr %s320, 8
        %s322 = scalar_lea.vmem [#allocation8], %s321
        %v324 = vld [vmem:[%s284] sm:$0xff]
        %v325 = vpack.c.bf16 %v324, %v324
        %v326 = vld [vmem:[#allocation5] sm:$0xff]
        %v327 = vld [vmem:[#allocation5 + $0x8] sm:$0xff]
        %v328 = vld [vmem:[#allocation5 + $0x10] sm:$0xff]
        %v329 = vld [vmem:[#allocation5 + $0x18] sm:$0xff]
        %v330 = vld [vmem:[#allocation5 + $0x20] sm:$0xff]
        %v331 = vld [vmem:[#allocation5 + $0x28] sm:$0xff]
        %v332 = vld [vmem:[#allocation5 + $0x30] sm:$0xff]
        %v333 = vld [vmem:[#allocation5 + $0x38] sm:$0xff]
        %v334 = vld [vmem:[#allocation5 + $0x40] sm:$0xff]
        %v335 = vld [vmem:[#allocation5 + $0x48] sm:$0xff]
        %v336 = vld [vmem:[#allocation5 + $0x50] sm:$0xff]
        %v337 = vld [vmem:[#allocation5 + $0x58] sm:$0xff]
        %v338 = vld [vmem:[#allocation5 + $0x60] sm:$0xff]
        %v339 = vld [vmem:[#allocation5 + $0x68] sm:$0xff]
        %v340 = vld [vmem:[#allocation5 + $0x70] sm:$0xff]
        %v341 = vld [vmem:[#allocation5 + $0x78] sm:$0xff]
        %v342 = vld [vmem:[%s2] sm:$0x3]
        %v344 = vlaneseq
        %v345 = vshrl.u32 %v344, 7
        %v346 = vsub.s32 0, %v345
        %v347 = vrot.slane %v342, %v346
        %v348 = vlaneseq
        %v349 = vshrl.u32 %v348, 7
        %v350 = vsub.s32 1, %v349
        %v351 = vrot.slane %v342, %v350
        %v370 = vunpack.c.l.b16 %v326
        %v371 = vunpack.c.h.b16 %v326
        %v372 = vunpack.c.l.b16 %v327
        %v373 = vunpack.c.h.b16 %v327
        %v374 = vunpack.c.l.b16 %v328
        %v375 = vunpack.c.h.b16 %v328
        %v376 = vunpack.c.l.b16 %v329
        %v377 = vunpack.c.h.b16 %v329
        %v378 = vunpack.c.l.b16 %v330
        %v379 = vunpack.c.h.b16 %v330
        %v380 = vunpack.c.l.b16 %v331
        %v381 = vunpack.c.h.b16 %v331
        %v382 = vunpack.c.l.b16 %v332
        %v383 = vunpack.c.h.b16 %v332
        %v384 = vunpack.c.l.b16 %v333
        %v385 = vunpack.c.h.b16 %v333
        %v386 = vunpack.c.l.b16 %v334
        %v387 = vunpack.c.h.b16 %v334
        %v388 = vunpack.c.l.b16 %v335
        %v389 = vunpack.c.h.b16 %v335
        %v390 = vunpack.c.l.b16 %v336
        %v391 = vunpack.c.h.b16 %v336
        %v392 = vunpack.c.l.b16 %v337
        %v393 = vunpack.c.h.b16 %v337
        %v394 = vunpack.c.l.b16 %v338
        %v395 = vunpack.c.h.b16 %v338
        %v396 = vunpack.c.l.b16 %v339
        %v397 = vunpack.c.h.b16 %v339
        %v398 = vunpack.c.l.b16 %v340
        %v399 = vunpack.c.h.b16 %v340
        %v400 = vunpack.c.l.b16 %v341
        %v401 = vunpack.c.h.b16 %v341
        %v402 = vpack.c.b16 %v372, %v370
        %v403 = vpack.c.b16 %v373, %v371
        %v404 = vpack.c.b16 %v376, %v374
        %v405 = vpack.c.b16 %v377, %v375
        %v406 = vpack.c.b16 %v380, %v378
        %v407 = vpack.c.b16 %v381, %v379
        %v408 = vpack.c.b16 %v384, %v382
        %v409 = vpack.c.b16 %v385, %v383
        %v410 = vpack.c.b16 %v388, %v386
        %v411 = vpack.c.b16 %v389, %v387
        %v412 = vpack.c.b16 %v392, %v390
        %v413 = vpack.c.b16 %v393, %v391
        %v414 = vpack.c.b16 %v396, %v394
        %v415 = vpack.c.b16 %v397, %v395
        %v416 = vpack.c.b16 %v400, %v398
        %v417 = vpack.c.b16 %v401, %v399
        %434 = vmatprep.subr.bf16.mxu0 %v403
        %435 = vmatpush1.bf16.msra.mxu0 %v402
        %436 = vmatprep.subr.bf16.mxu0 %v405
        %437 = vmatpush1.bf16.msra.mxu0 %v404
        %438 = vmatprep.subr.bf16.mxu0 %v407
        %439 = vmatpush1.bf16.msra.mxu0 %v406
        %440 = vmatprep.subr.bf16.mxu0 %v409
        %441 = vmatpush1.bf16.msra.mxu0 %v408
        %442 = vmatprep.subr.bf16.mxu0 %v411
        %443 = vmatpush1.bf16.msra.mxu0 %v410
        %444 = vmatprep.subr.bf16.mxu0 %v413
        %445 = vmatpush1.bf16.msra.mxu0 %v412
        %446 = vmatprep.subr.bf16.mxu0 %v415
        %447 = vmatpush1.bf16.msra.mxu0 %v414
        %448 = vmatprep.subr.bf16.mxu0 %v417
        %449 = vmatpush1.bf16.msra.mxu0 %v416
        %450 = vmatprep.subr.bf16.mxu0 0
        %451 = vmatpush1.bf16.msra.mxu0 0
        %452 = vmatprep.subr.bf16.mxu0 0
        %453 = vmatpush1.bf16.msra.mxu0 0
        %454 = vmatprep.subr.bf16.mxu0 0
        %455 = vmatpush1.bf16.msra.mxu0 0
        %456 = vmatprep.subr.bf16.mxu0 0
        %457 = vmatpush1.bf16.msra.mxu0 0
        %458 = vmatprep.subr.bf16.mxu0 0
        %459 = vmatpush1.bf16.msra.mxu0 0
        %460 = vmatprep.subr.bf16.mxu0 0
        %461 = vmatpush1.bf16.msra.mxu0 0
        %462 = vmatprep.subr.bf16.mxu0 0
        %463 = vmatpush1.bf16.msra.mxu0 0
        %464 = vmatprep.subr.bf16.mxu0 0
        %465 = vmatpush1.bf16.msra.mxu0 0
        %466 = vmatprep.mubr.bf16.mxu0 0
        %467 = vmatmul.mubr.bf16.gmra.mrb[0].mxu0 %v325
        %v468 = vpop.f32.mrb[0].mxu0
        %v469 = vadd.f32 %v347, %v468
        %v470 = vpop.f32.mrb[0].mxu0
        %v471 = vadd.f32 %v351, %v470
        %v472 = vpop.f32.mrb[0].mxu0
        %v473 = vpop.f32.mrb[0].mxu0
        %474 = vdwg.mxu0
        %v475 = vmul.f32 %v469, 0.5
        %v476 = vmul.f32 %v471, 0.5
        %v477 = vmul.f32 %v469, 0.70710677
        %v478 = vmul.f32 %v471, 0.70710677
        %v479 = verf.f32.pop %v477
        %v480 = verf.f32.pop %v478
        %v481 = vadd.f32 %v479, 1.0
        %v482 = vadd.f32 %v480, 1.0
        %v483 = vmul.f32 %v475, %v481
        %v484 = vmul.f32 %v476, %v482
        %v485 = vpack.c.bf16 %v483, %v483
        %v486 = vpack.c.bf16 %v484, %v484
        %v487 = vld [vmem:[#allocation7] sm:$0xf]
        %v488 = vld [vmem:[#allocation7 + $0x4] sm:$0xf]
        %v489 = vld [vmem:[#allocation7 + $0x8] sm:$0xf]
        %v490 = vld [vmem:[#allocation7 + $0xc] sm:$0xf]
        %v491 = vld [vmem:[#allocation7 + $0x10] sm:$0xf]
        %v492 = vld [vmem:[#allocation7 + $0x14] sm:$0xf]
        %v493 = vld [vmem:[#allocation7 + $0x18] sm:$0xf]
        %v494 = vld [vmem:[#allocation7 + $0x1c] sm:$0xf]
        %v495 = vld [vmem:[#allocation7 + $0x20] sm:$0xf]
        %v496 = vld [vmem:[#allocation7 + $0x24] sm:$0xf]
        %v497 = vld [vmem:[#allocation7 + $0x28] sm:$0xf]
        %v498 = vld [vmem:[#allocation7 + $0x2c] sm:$0xf]
        %v499 = vld [vmem:[#allocation7 + $0x30] sm:$0xf]
        %v500 = vld [vmem:[#allocation7 + $0x34] sm:$0xf]
        %v501 = vld [vmem:[#allocation7 + $0x38] sm:$0xf]
        %v502 = vld [vmem:[#allocation7 + $0x3c] sm:$0xf]
        %v503 = vld [vmem:[#allocation7 + $0x40] sm:$0xf]
        %v504 = vld [vmem:[#allocation7 + $0x44] sm:$0xf]
        %v505 = vld [vmem:[#allocation7 + $0x48] sm:$0xf]
        %v506 = vld [vmem:[#allocation7 + $0x4c] sm:$0xf]
        %v507 = vld [vmem:[#allocation7 + $0x50] sm:$0xf]
        %v508 = vld [vmem:[#allocation7 + $0x54] sm:$0xf]
        %v509 = vld [vmem:[#allocation7 + $0x58] sm:$0xf]
        %v510 = vld [vmem:[#allocation7 + $0x5c] sm:$0xf]
        %v511 = vld [vmem:[#allocation7 + $0x60] sm:$0xf]
        %v512 = vld [vmem:[#allocation7 + $0x64] sm:$0xf]
        %v513 = vld [vmem:[#allocation7 + $0x68] sm:$0xf]
        %v514 = vld [vmem:[#allocation7 + $0x6c] sm:$0xf]
        %v515 = vld [vmem:[#allocation7 + $0x70] sm:$0xf]
        %v516 = vld [vmem:[#allocation7 + $0x74] sm:$0xf]
        %v517 = vld [vmem:[#allocation7 + $0x78] sm:$0xf]
        %v518 = vld [vmem:[#allocation7 + $0x7c] sm:$0xf]
        %v519 = vld [vmem:[%s4] sm:$0x1]
        %v521 = vlaneseq
        %v522 = vshrl.u32 %v521, 7
        %v523 = vsub.s32 0, %v522
        %v524 = vrot.slane %v519, %v523
        %v558 = vunpack.c.l.b16 %v487
        %v559 = vunpack.c.l.b16 %v488
        %v560 = vunpack.c.l.b16 %v489
        %v561 = vunpack.c.l.b16 %v490
        %v562 = vunpack.c.l.b16 %v491
        %v563 = vunpack.c.l.b16 %v492
        %v564 = vunpack.c.l.b16 %v493
        %v565 = vunpack.c.l.b16 %v494
        %v566 = vunpack.c.l.b16 %v495
        %v567 = vunpack.c.l.b16 %v496
        %v568 = vunpack.c.l.b16 %v497
        %v569 = vunpack.c.l.b16 %v498
        %v570 = vunpack.c.l.b16 %v499
        %v571 = vunpack.c.l.b16 %v500
        %v572 = vunpack.c.l.b16 %v501
        %v573 = vunpack.c.l.b16 %v502
        %v574 = vunpack.c.l.b16 %v503
        %v575 = vunpack.c.l.b16 %v504
        %v576 = vunpack.c.l.b16 %v505
        %v577 = vunpack.c.l.b16 %v506
        %v578 = vunpack.c.l.b16 %v507
        %v579 = vunpack.c.l.b16 %v508
        %v580 = vunpack.c.l.b16 %v509
        %v581 = vunpack.c.l.b16 %v510
        %v582 = vunpack.c.l.b16 %v511
        %v583 = vunpack.c.l.b16 %v512
        %v584 = vunpack.c.l.b16 %v513
        %v585 = vunpack.c.l.b16 %v514
        %v586 = vunpack.c.l.b16 %v515
        %v587 = vunpack.c.l.b16 %v516
        %v588 = vunpack.c.l.b16 %v517
        %v589 = vunpack.c.l.b16 %v518
        %v590 = vpack.c.b16 %v559, %v558
        %v591 = vpack.c.b16 %v561, %v560
        %v592 = vpack.c.b16 %v563, %v562
        %v593 = vpack.c.b16 %v565, %v564
        %v594 = vpack.c.b16 %v567, %v566
        %v595 = vpack.c.b16 %v569, %v568
        %v596 = vpack.c.b16 %v571, %v570
        %v597 = vpack.c.b16 %v573, %v572
        %v598 = vpack.c.b16 %v575, %v574
        %v599 = vpack.c.b16 %v577, %v576
        %v600 = vpack.c.b16 %v579, %v578
        %v601 = vpack.c.b16 %v581, %v580
        %v602 = vpack.c.b16 %v583, %v582
        %v603 = vpack.c.b16 %v585, %v584
        %v604 = vpack.c.b16 %v587, %v586
        %v605 = vpack.c.b16 %v589, %v588
        %622 = vmatprep.subr.bf16.mxu0 0
        %623 = vmatpush1.bf16.msra.mxu0 %v590
        %624 = vmatprep.subr.bf16.mxu0 0
        %625 = vmatpush1.bf16.msra.mxu0 %v591
        %626 = vmatprep.subr.bf16.mxu0 0
        %627 = vmatpush1.bf16.msra.mxu0 %v592
        %628 = vmatprep.subr.bf16.mxu0 0
        %629 = vmatpush1.bf16.msra.mxu0 %v593
        %630 = vmatprep.subr.bf16.mxu0 0
        %631 = vmatpush1.bf16.msra.mxu0 %v594
        %632 = vmatprep.subr.bf16.mxu0 0
        %633 = vmatpush1.bf16.msra.mxu0 %v595
        %634 = vmatprep.subr.bf16.mxu0 0
        %635 = vmatpush1.bf16.msra.mxu0 %v596
        %636 = vmatprep.subr.bf16.mxu0 0
        %637 = vmatpush1.bf16.msra.mxu0 %v597
        %638 = vmatprep.subr.bf16.mxu0 0
        %639 = vmatpush1.bf16.msra.mxu0 %v598
        %640 = vmatprep.subr.bf16.mxu0 0
        %641 = vmatpush1.bf16.msra.mxu0 %v599
        %642 = vmatprep.subr.bf16.mxu0 0
        %643 = vmatpush1.bf16.msra.mxu0 %v600
        %644 = vmatprep.subr.bf16.mxu0 0
        %645 = vmatpush1.bf16.msra.mxu0 %v601
        %646 = vmatprep.subr.bf16.mxu0 0
        %647 = vmatpush1.bf16.msra.mxu0 %v602
        %648 = vmatprep.subr.bf16.mxu0 0
        %649 = vmatpush1.bf16.msra.mxu0 %v603
        %650 = vmatprep.subr.bf16.mxu0 0
        %651 = vmatpush1.bf16.msra.mxu0 %v604
        %652 = vmatprep.subr.bf16.mxu0 0
        %653 = vmatpush1.bf16.msra.mxu0 %v605
        %654 = vmatprep.mubr.bf16.mxu0 %v486
        %655 = vmatmul.mubr.bf16.gmra.mrb[0].mxu0 %v485
        %v656 = vpop.f32.mrb[0].mxu0
        %v657 = vadd.f32 %v524, %v656
        %v658 = vpop.f32.mrb[0].mxu0
        %v659 = vpop.f32.mrb[0].mxu0
        %v660 = vpop.f32.mrb[0].mxu0
        %661 = vdwg.mxu0
        %v662 = vadd.f32 %v324, %v657
        %v663 = vld [vmem:[%s5] sm:$0x1]
        %v664 = vld [vmem:[%s6] sm:$0x1]
        %665 = vadd.xlane.f32.xlu0 %v662
        %v666 = vpop.xlane.xlu0 %665
        %v667 = vrcp.pop 128.0
        %v668 = vmul.f32 %v666, %v667
        %v669 = vmul.f32 %v662, %v662
        %670 = vadd.xlane.f32.xlu0 %v669
        %v671 = vpop.xlane.xlu0 %670
        %v672 = vmul.f32 %v671, %v667
        %v673 = vmul.f32 %v668, %v668
        %v674 = vsub.f32 %v672, %v673
        %v675 = vsub.f32 %v662, %v668
        %v676 = vadd.f32 %v674, 1e-05
        %v677 = vrsqrt.pop %v676
        %v678 = vmul.f32 %v675, %v677
        %v680 = vlaneseq
        %v681 = vshrl.u32 %v680, 7
        %v682 = vsub.s32 0, %v681
        %v683 = vrot.slane %v663, %v682
        %v685 = vmul.f32 %v678, %v683
        %v687 = vlaneseq
        %v688 = vshrl.u32 %v687, 7
        %v689 = vsub.s32 0, %v688
        %v690 = vrot.slane %v664, %v689
        %v692 = vadd.f32 %v685, %v690
        %693 = vst [vmem:[%s322] sm:$0xff] %v692
        %s694 = sand.u32 %s185, 1
        %s695 = scalar_lea.sflag [#allocation4], %s694
        %s696 = sand.u32 %s185, 1
        %s697 = smul.addr %s696, 8
        %s698 = scalar_lea.vmem [#allocation8], %s697
        // Predicated region
        $region61: #{tpu_custom_call.1} parent=47 // pred_check
          %p699 = pneg %p195
        $region62: #{tpu_custom_call.1} parent=47 // pred_check_branch
          %701 = sbr.rel (%p699) target = $region64
        $region63: #{tpu_custom_call.1} parent=47 // pred_region
          %s703 = ssub.s32 128, 128
          %704 = vsyncadd %s695, %s703
          %s705 = smul.addr %s25, 128
          %s706 = scalar_lea.hbm %s7, %s705
          %s708 = sshll.u32 %s698, 4
          %s709 = int_to_ptr.vmem [resolvable:$true] %s708
          %711 = dma.vmem_to_hbm [thread:$0]  %s709, 128, %s706, %s695
        $region64: #{tpu_custom_call.1} parent=47 // pred_fallthru
          _
      $region48: #{tpu_custom_call.1} parent=5 // pred_fallthru
        _
      %p712 = scmp.le.s32.totalorder 2, %s20
      // Predicated region
      $region65: #{tpu_custom_call.1} parent=5 // pred_check
        %p713 = pneg %p712
      $region66: #{tpu_custom_call.1} parent=5 // pred_check_branch
        %715 = sbr.rel (%p713) target = $region68
      $region67: #{tpu_custom_call.1} parent=5 // pred_region
        %s716 = ssub.s32 %s20, 2
        // Predicated region
        $region69: #{tpu_custom_call.1} parent=67 // pred_check
          %p717 = pneg %p201
        $region70: #{tpu_custom_call.1} parent=67 // pred_check_branch
          %719 = sbr.rel (%p717) target = $region72
        $region71: #{tpu_custom_call.1} parent=67 // pred_region
          %s720 = sand.u32 %s186, 1
          %s721 = scalar_lea.sflag [#allocation4], %s720
          %s722 = sand.u32 %s186, 1
          %s723 = smul.addr %s722, 8
          %s724 = scalar_lea.vmem [#allocation8], %s723
          %725 = dma.done %s721, 128
        $region72: #{tpu_custom_call.1} parent=67 // pred_fallthru
          _
      $region68: #{tpu_custom_call.1} parent=5 // pred_fallthru
        _
    $region6: #{tpu_custom_call.1} parent=1 // loop_footer
      %s24 = sadd.s32 1, %s20
    $region7: #{tpu_custom_call.1} parent=1 // loop_footer_branch
      %19 = sbr.rel target = $region3
    $region8: #{tpu_custom_call.1} parent=1 // loop_exit
      _
    %726 = vsyncpa [#allocation3], 1
    %s727 = scalar_lea.sflag [#allocation3], 1
    %728 = vsyncpa %s727, 1
    %729 = vsyncpa [#allocation6], 1
    %730 = vsyncpa [#allocation4], 1
    %s731 = scalar_lea.sflag [#allocation4], 1
    %732 = vsyncpa %s731, 1

</llo_original>
